<compile_context>
chip_gen: v7x
topology: tpu7x:2x2x1
jax: 0.10.0
libtpu: 0.0.40
codegen_flags: <defaults>
</compile_context>

<pallas_src>
import functools

import jax
import jax.numpy as jnp
from jax import lax
from jax.experimental import pallas as pl
from jax.experimental.pallas import tpu as pltpu

BN_EPS = 1e-5
LANE = 128


def _round_up(n, m):
    return (n + m - 1) // m * m


def lnn3_kernel(x_ref, w3_ref, bn_ref, w2_ref, w1_ref, out_ref,
                s1a, s1b, s2a, s2b, *, input_size, true_batch, batch_tile):
    """Transposed-layout fused forward.

    x_ref   : (input_size, tb)   batch tile, batch on lanes (padded cols are 0)
    w3_ref  : (width, input_size)
    bn_ref  : (width, 4)         columns = [gamma2, beta2, gamma1, beta1]
    w2_ref  : (width, width)
    w1_ref  : (out_dim, width)
    out_ref : (out_dim, tb)      (pass plane squeezed away by the BlockSpec)
    s1a/s1b : (width, 1) scratch -> BN1 sum/sumsq, overwritten by scale/shift
    s2a/s2b : (width, 1) scratch -> BN2 sum/sumsq, overwritten by scale/shift
    """
    p = pl.program_id(0)    # pass: 0 = BN1 stats, 1 = BN2 stats, 2 = emit out
    bt = pl.program_id(1)   # batch tile index
    inv_n = 1.0 / float(true_batch)

    @pl.when(jnp.logical_and(p == 0, bt == 0))
    def _init():
        s1a[...] = jnp.zeros_like(s1a)
        s1b[...] = jnp.zeros_like(s1b)
        s2a[...] = jnp.zeros_like(s2a)
        s2b[...] = jnp.zeros_like(s2b)

    # Lane mask: 1.0 for real batch columns, 0.0 for zero-padded columns.
    col = lax.broadcasted_iota(jnp.int32, (1, batch_tile), 1) + bt * batch_tile
    mask = (col < true_batch).astype(jnp.float32)

    # ---- linear_3: h1^T = W3 @ x^T. K = input_size is tiny -> unrolled VPU FMAs.
    x = x_ref[...]        # (input_size, tb)
    w3 = w3_ref[...]      # (width, input_size)
    if input_size <= 8:
        h1 = w3[:, 0:1] * x[0:1, :]
        for k in range(1, input_size):
            h1 = h1 + w3[:, k:k + 1] * x[k:k + 1, :]
    else:
        h1 = jnp.dot(w3, x, preferred_element_type=jnp.float32,
                     precision=lax.Precision.HIGHEST)
    # Zero-padded batch columns of x stay exactly 0 in h1 (no bias).

    @pl.when(p == 0)
    def _acc_bn1():
        s1a[...] += jnp.sum(h1, axis=1, keepdims=True)
        s1b[...] += jnp.sum(h1 * h1, axis=1, keepdims=True)

    @pl.when(jnp.logical_and(p == 1, bt == 0))
    def _finalize_bn1():
        mean = s1a[...] * inv_n
        var = jnp.maximum(s1b[...] * inv_n - mean * mean, 0.0)
        scale = bn_ref[:, 0:1] * lax.rsqrt(var + BN_EPS)
        s1a[...] = scale
        s1b[...] = bn_ref[:, 1:2] - mean * scale

    @pl.when(jnp.logical_and(p == 2, bt == 0))
    def _finalize_bn2():
        mean = s2a[...] * inv_n
        var = jnp.maximum(s2b[...] * inv_n - mean * mean, 0.0)
        scale = bn_ref[:, 2:3] * lax.rsqrt(var + BN_EPS)
        s2a[...] = scale
        s2b[...] = bn_ref[:, 3:4] - mean * scale

    @pl.when(p >= 1)
    def _compute():
        # bn_2 folded into scale/shift; re-zero padded columns so BN2 stats and
        # the BN2 accumulation below stay exact.
        h1n = (h1 * s1a[...] + s1b[...]) * mask
        h2 = jnp.dot(w2_ref[...], h1n, preferred_element_type=jnp.float32,
                     precision=lax.Precision.HIGHEST)          # (width, tb)

        @pl.when(p == 1)
        def _acc_bn2():
            s2a[...] += jnp.sum(h2, axis=1, keepdims=True)
            s2b[...] += jnp.sum(h2 * h2, axis=1, keepdims=True)

        @pl.when(p == 2)
        def _emit():
            h2n = h2 * s2a[...] + s2b[...]                      # bn_1 folded
            out_ref[...] = jnp.dot(
                w1_ref[...], h2n, preferred_element_type=jnp.float32,
                precision=lax.Precision.HIGHEST).astype(out_ref.dtype)


def prepare_params(params):
    """One-time (per model) weight prep for the kernel: transposed weights
    (out_features, in_features) and the 4 BN vectors packed as (width, 4)."""
    w3t = jnp.asarray(params["w3"], jnp.float32).T      # (width, input_size)
    w2t = jnp.asarray(params["w2"], jnp.float32).T      # (width, width)
    w1t = jnp.asarray(params["w1"], jnp.float32).T      # (out_dim, width)
    width = w3t.shape[0]
    bn = jnp.stack(
        [jnp.asarray(params[k], jnp.float32).reshape(width)
         for k in ("g2", "b2", "g1", "b1")], axis=1)     # (width, 4)
    return {"w3t": w3t, "w2t": w2t, "w1t": w1t, "bn": bn}


def lnn3_forward(x, prepped, *, max_batch_tile=None):
    """x: (B, ...) -> flattened to (B, input_size). prepped: prepare_params()."""
    w3t, bn, w2t, w1t = prepped["w3t"], prepped["bn"], prepped["w2t"], prepped["w1t"]
    width, input_size = w3t.shape
    out_dim = w1t.shape[0]

    B = x.shape[0]
    x = x.reshape(B, -1).astype(jnp.float32)             # nn.Flatten()
    assert x.shape[1] == input_size

    # Chip-aware VMEM budget (v7x: 64 MiB/TC, v5e/v6e: 128 MiB).
    try:
        vmem_cap = int(pltpu.get_tpu_info().vmem_capacity_bytes)
    except Exception:  # fall back to the smallest generation (v7x per-TC)
        vmem_cap = 64 << 20
    vmem_limit = min(int(vmem_cap * 0.9), 127 << 20)

    # Batch tile (lanes): largest multiple of 128 whose working set (double-
    # buffered x/out blocks + ~5 live (width, tb) f32 temporaries) fits in
    # ~30% of VMEM, leaving room for the pipeline and resident weights.
    bytes_per_col = 4 * (2 * input_size + 2 * out_dim + 5 * width)
    budget = max((vmem_cap * 3) // 10, 2 << 20)
    tb_cap = max((budget // bytes_per_col) // LANE * LANE, LANE)
    if max_batch_tile is not None:
        tb_cap = min(tb_cap, max(LANE, (max_batch_tile // LANE) * LANE))
    b_pad = _round_up(max(B, 1), LANE)
    tb = min(tb_cap, b_pad)
    b_pad = _round_up(b_pad, tb)
    nbt = b_pad // tb

    # Transposed, batch-padded input: (input_size, b_pad); padded columns = 0.
    x_t = jnp.zeros((input_size, b_pad), jnp.float32).at[:, :B].set(x.T)

    kernel = functools.partial(lnn3_kernel, input_size=input_size,
                               true_batch=B, batch_tile=tb)

    grid_spec = pltpu.PrefetchScalarGridSpec(
        num_scalar_prefetch=0,
        grid=(3, nbt),  # (pass, batch tile); pass MUST be outermost for BN stats
        in_specs=[
            pl.BlockSpec((input_size, tb), lambda p, bt: (0, bt)),   # x^T tile
            pl.BlockSpec((width, input_size), lambda p, bt: (0, 0)), # W3 (resident)
            pl.BlockSpec((width, 4), lambda p, bt: (0, 0)),          # BN params
            pl.BlockSpec((width, width), lambda p, bt: (0, 0)),      # W2 (resident)
            pl.BlockSpec((out_dim, width), lambda p, bt: (0, 0)),    # W1 (resident)
        ],
        # Leading "pass" plane (squeezed in-kernel) so each output block is
        # written exactly once; the wrapper keeps plane 2 only.
        out_specs=pl.BlockSpec((None, out_dim, tb), lambda p, bt: (p, 0, bt)),
        scratch_shapes=[pltpu.VMEM((width, 1), jnp.float32)] * 4,
    )

    out_all = pl.pallas_call(
        kernel,
        out_shape=jax.ShapeDtypeStruct((3, out_dim, b_pad), jnp.float32),
        grid_spec=grid_spec,
        compiler_params=pltpu.CompilerParams(
            # Both axes are sequential: the pass axis is a dependency chain and
            # the batch axis accumulates into shared scratch (see TODO above).
            dimension_semantics=("arbitrary", "arbitrary"),
            vmem_limit_bytes=vmem_limit),
    )(x_t, w3t, bn, w2t, w1t)

    return out_all[2, :, :B].T                            # (B, out_dim)


def lnn3_reference(x, params):
    """Pure-JAX reference (matches the PyTorch module)."""
    x = x.reshape(x.shape[0], -1)
    h = x @ params["w3"]
    m = jnp.mean(h, axis=0, keepdims=True)
    v = jnp.mean((h - m) ** 2, axis=0, keepdims=True)
    h = (h - m) * lax.rsqrt(v + BN_EPS) * params["g2"] + params["b2"]
    h = h @ params["w2"]
    m = jnp.mean(h, axis=0, keepdims=True)
    v = jnp.mean((h - m) ** 2, axis=0, keepdims=True)
    h = (h - m) * lax.rsqrt(v + BN_EPS) * params["g1"] + params["b1"]
    return h @ params["w1"]


def init_params(key, input_size, width, output_dim):
    """Deterministic init mimicking nn.Linear default (uniform +-1/sqrt(fan_in)).
    Weights stored pre-transposed as (in_features, out_features)."""
    k3, k2, k1 = jax.random.split(key, 3)

    def lin(k, fan_in, fan_out):
        bound = 1.0 / jnp.sqrt(float(fan_in))
        w = jax.random.uniform(k, (fan_out, fan_in), jnp.float32, -bound, bound)
        return w.T

    return {
        "w3": lin(k3, input_size, width),       # linear_3: input_size -> width
        "w2": lin(k2, width, width),            # linear_2: width -> width
        "w1": lin(k1, width, output_dim),       # linear_1: width -> output_dim
        "g2": jnp.ones((1, width), jnp.float32),    # bn_2 gamma
        "b2": jnp.zeros((1, width), jnp.float32),   # bn_2 beta
        "g1": jnp.ones((1, width), jnp.float32),    # bn_1 gamma
        "b1": jnp.zeros((1, width), jnp.float32),   # bn_1 beta
    }


if __name__ == "__main__":
    INPUT_SIZE = 2    # module default input_size=2
    WIDTH = 32        # args.width
    OUTPUT_DIM = 1
    BATCH = 8

    key = jax.random.PRNGKey(0)
    kx, kp, kx2 = jax.random.split(key, 3)
    params = init_params(kp, INPUT_SIZE, WIDTH, OUTPUT_DIM)
    prepped = prepare_params(params)   # weight prep hoisted out of the forward

    # Small, single-tile case.
    x = jax.random.normal(kx, (BATCH, INPUT_SIZE), jnp.float32)
    out = jax.block_until_ready(lnn3_forward(x, prepped))
    ref = lnn3_reference(x, params)
    assert out.shape == (BATCH, OUTPUT_DIM)
    assert bool(jnp.allclose(out, ref, atol=2e-5, rtol=2e-5)), \
        float(jnp.max(jnp.abs(out - ref)))

    # Multi-tile / ragged-batch path (3 batch tiles of 128, batch 300 padded).
    x2 = jax.random.normal(kx2, (300, INPUT_SIZE), jnp.float32)
    out2 = jax.block_until_ready(lnn3_forward(x2, prepped, max_batch_tile=128))
    ref2 = lnn3_reference(x2, params)
    assert out2.shape == (300, OUTPUT_DIM)
    assert bool(jnp.allclose(out2, ref2, atol=2e-5, rtol=2e-5)), \
        float(jnp.max(jnp.abs(out2 - ref2)))

    print("KERNEL_OK")
</pallas_src>

<mosaic_0001>
module attributes {stable_mosaic.version = 11 : i64} {
  func.func @lnn3_kernel(%arg0: i32, %arg1: i32, %arg2: memref<2x128xf32, #tpu.memory_space<vmem>>, %arg3: memref<32x2xf32, #tpu.memory_space<vmem>>, %arg4: memref<32x4xf32, #tpu.memory_space<vmem>>, %arg5: memref<32x32xf32, #tpu.memory_space<vmem>>, %arg6: memref<1x32xf32, #tpu.memory_space<vmem>>, %arg7: memref<1x1x128xf32, #tpu.memory_space<vmem>>, %arg8: memref<32x1xf32, #tpu.memory_space<vmem>>, %arg9: memref<32x1xf32, #tpu.memory_space<vmem>>, %arg10: memref<32x1xf32, #tpu.memory_space<vmem>>, %arg11: memref<32x1xf32, #tpu.memory_space<vmem>>) attributes {dimension_semantics = [#tpu.dimension_semantics<arbitrary>, #tpu.dimension_semantics<arbitrary>], iteration_bounds = array<i64: 3, 1>, scalar_prefetch = 0 : i64, scratch_operands = 4 : i64, tpu.core_type = #tpu.core_type<tc>, window_params = [{transform_indices = @transform_0, window_bounds = array<i64: 2, 128>}, {pipeline_mode = #tpu.pipeline_mode<synchronous>, transform_indices = @transform_1, window_bounds = array<i64: 32, 2>}, {pipeline_mode = #tpu.pipeline_mode<synchronous>, transform_indices = @transform_2, window_bounds = array<i64: 32, 4>}, {pipeline_mode = #tpu.pipeline_mode<synchronous>, transform_indices = @transform_3, window_bounds = array<i64: 32, 32>}, {pipeline_mode = #tpu.pipeline_mode<synchronous>, transform_indices = @transform_4, window_bounds = array<i64: 1, 32>}, {transform_indices = @transform_5, window_bounds = array<i64: 1, 1, 128>}]} {
    %c0_i32 = arith.constant 0 : i32
    %0 = arith.cmpi eq, %arg0, %c0_i32 : i32
    %c0_i32_0 = arith.constant 0 : i32
    %1 = arith.cmpi eq, %arg1, %c0_i32_0 : i32
    %2 = arith.andi %0, %1 : i1
    %3 = arith.extui %2 : i1 to i32
    %c0_i32_1 = arith.constant 0 : i32
    %4 = arith.cmpi ne, %3, %c0_i32_1 : i32
    scf.if %4 {
      %cst = arith.constant 0.000000e+00 : f32
      %42 = vector.broadcast %cst : f32 to vector<32x1xf32>
      %c0_13 = arith.constant 0 : index
      %c0_14 = arith.constant 0 : index
      %43 = vector.load %arg8[%c0_13, %c0_14] : memref<32x1xf32, #tpu.memory_space<vmem>>, vector<32x1xf32>
      tpu.vector_store %arg8[%c0_13, %c0_14], %42 {strides = array<i32>} : memref<32x1xf32, #tpu.memory_space<vmem>>, vector<32x1xf32>,
      %cst_15 = arith.constant 0.000000e+00 : f32
      %44 = vector.broadcast %cst_15 : f32 to vector<32x1xf32>
      %c0_16 = arith.constant 0 : index
      %c0_17 = arith.constant 0 : index
      %45 = vector.load %arg9[%c0_16, %c0_17] : memref<32x1xf32, #tpu.memory_space<vmem>>, vector<32x1xf32>
      tpu.vector_store %arg9[%c0_16, %c0_17], %44 {strides = array<i32>} : memref<32x1xf32, #tpu.memory_space<vmem>>, vector<32x1xf32>,
      %cst_18 = arith.constant 0.000000e+00 : f32
      %46 = vector.broadcast %cst_18 : f32 to vector<32x1xf32>
      %c0_19 = arith.constant 0 : index
      %c0_20 = arith.constant 0 : index
      %47 = vector.load %arg10[%c0_19, %c0_20] : memref<32x1xf32, #tpu.memory_space<vmem>>, vector<32x1xf32>
      tpu.vector_store %arg10[%c0_19, %c0_20], %46 {strides = array<i32>} : memref<32x1xf32, #tpu.memory_space<vmem>>, vector<32x1xf32>,
      %cst_21 = arith.constant 0.000000e+00 : f32
      %48 = vector.broadcast %cst_21 : f32 to vector<32x1xf32>
      %c0_22 = arith.constant 0 : index
      %c0_23 = arith.constant 0 : index
      %49 = vector.load %arg11[%c0_22, %c0_23] : memref<32x1xf32, #tpu.memory_space<vmem>>, vector<32x1xf32>
      tpu.vector_store %arg11[%c0_22, %c0_23], %48 {strides = array<i32>} : memref<32x1xf32, #tpu.memory_space<vmem>>, vector<32x1xf32>,
    } else {
    }
    %5 = tpu.iota {dimensions = array<i32: 1>} : vector<1x128xi32>
    %c128_i32 = arith.constant 128 : i32
    %6 = arith.muli %arg1, %c128_i32 : i32
    %7 = vector.broadcast %6 : i32 to vector<1x128xi32>
    %8 = arith.addi %5, %7 : vector<1x128xi32>
    %c8_i32 = arith.constant 8 : i32
    %9 = vector.broadcast %c8_i32 : i32 to vector<1x128xi32>
    %10 = arith.cmpi slt, %8, %9 : vector<1x128xi32>
    %11 = arith.extui %10 : vector<1x128xi1> to vector<1x128xi32>
    %12 = arith.sitofp %11 : vector<1x128xi32> to vector<1x128xf32>
    %c0 = arith.constant 0 : index
    %c0_2 = arith.constant 0 : index
    %13 = vector.load %arg2[%c0, %c0_2] : memref<2x128xf32, #tpu.memory_space<vmem>>, vector<2x128xf32>
    %c0_3 = arith.constant 0 : index
    %c0_4 = arith.constant 0 : index
    %14 = vector.load %arg3[%c0_3, %c0_4] : memref<32x2xf32, #tpu.memory_space<vmem>>, vector<32x2xf32>
    %15 = vector.extract_strided_slice %14 {offsets = [0, 0], sizes = [32, 1], strides = [1, 1]} : vector<32x2xf32> to vector<32x1xf32>
    %16 = vector.extract_strided_slice %13 {offsets = [0, 0], sizes = [1, 128], strides = [1, 1]} : vector<2x128xf32> to vector<1x128xf32>
    %17 = vector.broadcast %15 : vector<32x1xf32> to vector<32x128xf32>
    %18 = vector.broadcast %16 : vector<1x128xf32> to vector<32x128xf32>
    %19 = arith.mulf %17, %18 : vector<32x128xf32>
    %20 = vector.extract_strided_slice %14 {offsets = [0, 1], sizes = [32, 1], strides = [1, 1]} : vector<32x2xf32> to vector<32x1xf32>
    %21 = vector.extract_strided_slice %13 {offsets = [1, 0], sizes = [1, 128], strides = [1, 1]} : vector<2x128xf32> to vector<1x128xf32>
    %22 = vector.broadcast %20 : vector<32x1xf32> to vector<32x128xf32>
    %23 = vector.broadcast %21 : vector<1x128xf32> to vector<32x128xf32>
    %24 = arith.mulf %22, %23 : vector<32x128xf32>
    %25 = arith.addf %19, %24 : vector<32x128xf32>
    %c0_i32_5 = arith.constant 0 : i32
    %26 = arith.cmpi eq, %arg0, %c0_i32_5 : i32
    %27 = arith.extui %26 : i1 to i32
    %c0_i32_6 = arith.constant 0 : i32
    %28 = arith.cmpi ne, %27, %c0_i32_6 : i32
    scf.if %28 {
      %c0_13 = arith.constant 0 : index
      %c0_14 = arith.constant 0 : index
      %42 = vector.load %arg8[%c0_13, %c0_14] : memref<32x1xf32, #tpu.memory_space<vmem>>, vector<32x1xf32>
      %cst = arith.constant dense<0.000000e+00> : vector<32xf32>
      %43 = vector.multi_reduction <add>, %25, %cst [1] : vector<32x128xf32> to vector<32xf32>
      %44 = vector.shape_cast %43 : vector<32xf32> to vector<32x1xf32>
      %45 = arith.addf %42, %44 : vector<32x1xf32>
      %c0_15 = arith.constant 0 : index
      %c0_16 = arith.constant 0 : index
      %46 = vector.load %arg8[%c0_15, %c0_16] : memref<32x1xf32, #tpu.memory_space<vmem>>, vector<32x1xf32>
      tpu.vector_store %arg8[%c0_15, %c0_16], %45 {strides = array<i32>} : memref<32x1xf32, #tpu.memory_space<vmem>>, vector<32x1xf32>,
      %c0_17 = arith.constant 0 : index
      %c0_18 = arith.constant 0 : index
      %47 = vector.load %arg9[%c0_17, %c0_18] : memref<32x1xf32, #tpu.memory_space<vmem>>, vector<32x1xf32>
      %48 = arith.mulf %25, %25 : vector<32x128xf32>
      %cst_19 = arith.constant dense<0.000000e+00> : vector<32xf32>
      %49 = vector.multi_reduction <add>, %48, %cst_19 [1] : vector<32x128xf32> to vector<32xf32>
      %50 = vector.shape_cast %49 : vector<32xf32> to vector<32x1xf32>
      %51 = arith.addf %47, %50 : vector<32x1xf32>
      %c0_20 = arith.constant 0 : index
      %c0_21 = arith.constant 0 : index
      %52 = vector.load %arg9[%c0_20, %c0_21] : memref<32x1xf32, #tpu.memory_space<vmem>>, vector<32x1xf32>
      tpu.vector_store %arg9[%c0_20, %c0_21], %51 {strides = array<i32>} : memref<32x1xf32, #tpu.memory_space<vmem>>, vector<32x1xf32>,
    } else {
    }
    %c1_i32 = arith.constant 1 : i32
    %29 = arith.cmpi eq, %arg0, %c1_i32 : i32
    %c0_i32_7 = arith.constant 0 : i32
    %30 = arith.cmpi eq, %arg1, %c0_i32_7 : i32
    %31 = arith.andi %29, %30 : i1
    %32 = arith.extui %31 : i1 to i32
    %c0_i32_8 = arith.constant 0 : i32
    %33 = arith.cmpi ne, %32, %c0_i32_8 : i32
    scf.if %33 {
      %c0_13 = arith.constant 0 : index
      %c0_14 = arith.constant 0 : index
      %42 = vector.load %arg8[%c0_13, %c0_14] : memref<32x1xf32, #tpu.memory_space<vmem>>, vector<32x1xf32>
      %cst = arith.constant 1.250000e-01 : f32
      %43 = vector.broadcast %cst : f32 to vector<32x1xf32>
      %44 = arith.mulf %42, %43 : vector<32x1xf32>
      %c0_15 = arith.constant 0 : index
      %c0_16 = arith.constant 0 : index
      %45 = vector.load %arg9[%c0_15, %c0_16] : memref<32x1xf32, #tpu.memory_space<vmem>>, vector<32x1xf32>
      %cst_17 = arith.constant 1.250000e-01 : f32
      %46 = vector.broadcast %cst_17 : f32 to vector<32x1xf32>
      %47 = arith.mulf %45, %46 : vector<32x1xf32>
      %48 = arith.mulf %44, %44 : vector<32x1xf32>
      %49 = arith.subf %47, %48 : vector<32x1xf32>
      %cst_18 = arith.constant 0.000000e+00 : f32
      %50 = vector.broadcast %cst_18 : f32 to vector<32x1xf32>
      %51 = arith.maximumf %49, %50 : vector<32x1xf32>
      %c0_19 = arith.constant 0 : index
      %c0_20 = arith.constant 0 : index
      %52 = vector.load %arg4[%c0_19, %c0_20] : memref<32x4xf32, #tpu.memory_space<vmem>>, vector<32x1xf32>
      %cst_21 = arith.constant 9.99999974E-6 : f32
      %53 = vector.broadcast %cst_21 : f32 to vector<32x1xf32>
      %54 = arith.addf %51, %53 : vector<32x1xf32>
      %55 = math.rsqrt %54 : vector<32x1xf32>
      %56 = arith.mulf %52, %55 : vector<32x1xf32>
      %c0_22 = arith.constant 0 : index
      %c0_23 = arith.constant 0 : index
      %57 = vector.load %arg8[%c0_22, %c0_23] : memref<32x1xf32, #tpu.memory_space<vmem>>, vector<32x1xf32>
      tpu.vector_store %arg8[%c0_22, %c0_23], %56 {strides = array<i32>} : memref<32x1xf32, #tpu.memory_space<vmem>>, vector<32x1xf32>,
      %c0_24 = arith.constant 0 : index
      %c1 = arith.constant 1 : index
      %58 = vector.load %arg4[%c0_24, %c1] : memref<32x4xf32, #tpu.memory_space<vmem>>, vector<32x1xf32>
      %59 = arith.mulf %44, %56 : vector<32x1xf32>
      %60 = arith.subf %58, %59 : vector<32x1xf32>
      %c0_25 = arith.constant 0 : index
      %c0_26 = arith.constant 0 : index
      %61 = vector.load %arg9[%c0_25, %c0_26] : memref<32x1xf32, #tpu.memory_space<vmem>>, vector<32x1xf32>
      tpu.vector_store %arg9[%c0_25, %c0_26], %60 {strides = array<i32>} : memref<32x1xf32, #tpu.memory_space<vmem>>, vector<32x1xf32>,
    } else {
    }
    %c2_i32 = arith.constant 2 : i32
    %34 = arith.cmpi eq, %arg0, %c2_i32 : i32
    %c0_i32_9 = arith.constant 0 : i32
    %35 = arith.cmpi eq, %arg1, %c0_i32_9 : i32
    %36 = arith.andi %34, %35 : i1
    %37 = arith.extui %36 : i1 to i32
    %c0_i32_10 = arith.constant 0 : i32
    %38 = arith.cmpi ne, %37, %c0_i32_10 : i32
    scf.if %38 {
      %c0_13 = arith.constant 0 : index
      %c0_14 = arith.constant 0 : index
      %42 = vector.load %arg10[%c0_13, %c0_14] : memref<32x1xf32, #tpu.memory_space<vmem>>, vector<32x1xf32>
      %cst = arith.constant 1.250000e-01 : f32
      %43 = vector.broadcast %cst : f32 to vector<32x1xf32>
      %44 = arith.mulf %42, %43 : vector<32x1xf32>
      %c0_15 = arith.constant 0 : index
      %c0_16 = arith.constant 0 : index
      %45 = vector.load %arg11[%c0_15, %c0_16] : memref<32x1xf32, #tpu.memory_space<vmem>>, vector<32x1xf32>
      %cst_17 = arith.constant 1.250000e-01 : f32
      %46 = vector.broadcast %cst_17 : f32 to vector<32x1xf32>
      %47 = arith.mulf %45, %46 : vector<32x1xf32>
      %48 = arith.mulf %44, %44 : vector<32x1xf32>
      %49 = arith.subf %47, %48 : vector<32x1xf32>
      %cst_18 = arith.constant 0.000000e+00 : f32
      %50 = vector.broadcast %cst_18 : f32 to vector<32x1xf32>
      %51 = arith.maximumf %49, %50 : vector<32x1xf32>
      %c0_19 = arith.constant 0 : index
      %c2 = arith.constant 2 : index
      %52 = vector.load %arg4[%c0_19, %c2] : memref<32x4xf32, #tpu.memory_space<vmem>>, vector<32x1xf32>
      %cst_20 = arith.constant 9.99999974E-6 : f32
      %53 = vector.broadcast %cst_20 : f32 to vector<32x1xf32>
      %54 = arith.addf %51, %53 : vector<32x1xf32>
      %55 = math.rsqrt %54 : vector<32x1xf32>
      %56 = arith.mulf %52, %55 : vector<32x1xf32>
      %c0_21 = arith.constant 0 : index
      %c0_22 = arith.constant 0 : index
      %57 = vector.load %arg10[%c0_21, %c0_22] : memref<32x1xf32, #tpu.memory_space<vmem>>, vector<32x1xf32>
      tpu.vector_store %arg10[%c0_21, %c0_22], %56 {strides = array<i32>} : memref<32x1xf32, #tpu.memory_space<vmem>>, vector<32x1xf32>,
      %c0_23 = arith.constant 0 : index
      %c3 = arith.constant 3 : index
      %58 = vector.load %arg4[%c0_23, %c3] : memref<32x4xf32, #tpu.memory_space<vmem>>, vector<32x1xf32>
      %59 = arith.mulf %44, %56 : vector<32x1xf32>
      %60 = arith.subf %58, %59 : vector<32x1xf32>
      %c0_24 = arith.constant 0 : index
      %c0_25 = arith.constant 0 : index
      %61 = vector.load %arg11[%c0_24, %c0_25] : memref<32x1xf32, #tpu.memory_space<vmem>>, vector<32x1xf32>
      tpu.vector_store %arg11[%c0_24, %c0_25], %60 {strides = array<i32>} : memref<32x1xf32, #tpu.memory_space<vmem>>, vector<32x1xf32>,
    } else {
    }
    %c1_i32_11 = arith.constant 1 : i32
    %39 = arith.cmpi sge, %arg0, %c1_i32_11 : i32
    %40 = arith.extui %39 : i1 to i32
    %c0_i32_12 = arith.constant 0 : i32
    %41 = arith.cmpi ne, %40, %c0_i32_12 : i32
    scf.if %41 {
      %c0_13 = arith.constant 0 : index
      %c0_14 = arith.constant 0 : index
      %42 = vector.load %arg8[%c0_13, %c0_14] : memref<32x1xf32, #tpu.memory_space<vmem>>, vector<32x1xf32>
      %43 = vector.broadcast %42 : vector<32x1xf32> to vector<32x128xf32>
      %44 = arith.mulf %25, %43 : vector<32x128xf32>
      %c0_15 = arith.constant 0 : index
      %c0_16 = arith.constant 0 : index
      %45 = vector.load %arg9[%c0_15, %c0_16] : memref<32x1xf32, #tpu.memory_space<vmem>>, vector<32x1xf32>
      %46 = vector.broadcast %45 : vector<32x1xf32> to vector<32x128xf32>
      %47 = arith.addf %44, %46 : vector<32x128xf32>
      %48 = vector.broadcast %12 : vector<1x128xf32> to vector<32x128xf32>
      %49 = arith.mulf %47, %48 : vector<32x128xf32>
      %c0_17 = arith.constant 0 : index
      %c0_18 = arith.constant 0 : index
      %50 = vector.load %arg5[%c0_17, %c0_18] : memref<32x32xf32, #tpu.memory_space<vmem>>, vector<32x32xf32>
      %cst = arith.constant dense<0.000000e+00> : vector<32x128xf32>
      %51 = tpu.matmul %50, %49, %cst {dimension_numbers = #tpu.dot_dimension_numbers<[1], [0], [0], [1], [0, 0, 1, 1], [], []>, precision = #tpu.contract_precision<fp32>} : vector<32x32xf32>, vector<32x128xf32>, vector<32x128xf32> -> vector<32x128xf32>
      %c1_i32_19 = arith.constant 1 : i32
      %52 = arith.cmpi eq, %arg0, %c1_i32_19 : i32
      %53 = arith.extui %52 : i1 to i32
      %c0_i32_20 = arith.constant 0 : i32
      %54 = arith.cmpi ne, %53, %c0_i32_20 : i32
      scf.if %54 {
        %c0_23 = arith.constant 0 : index
        %c0_24 = arith.constant 0 : index
        %58 = vector.load %arg10[%c0_23, %c0_24] : memref<32x1xf32, #tpu.memory_space<vmem>>, vector<32x1xf32>
        %cst_25 = arith.constant dense<0.000000e+00> : vector<32xf32>
        %59 = vector.multi_reduction <add>, %51, %cst_25 [1] : vector<32x128xf32> to vector<32xf32>
        %60 = vector.shape_cast %59 : vector<32xf32> to vector<32x1xf32>
        %61 = arith.addf %58, %60 : vector<32x1xf32>
        %c0_26 = arith.constant 0 : index
        %c0_27 = arith.constant 0 : index
        %62 = vector.load %arg10[%c0_26, %c0_27] : memref<32x1xf32, #tpu.memory_space<vmem>>, vector<32x1xf32>
        tpu.vector_store %arg10[%c0_26, %c0_27], %61 {strides = array<i32>} : memref<32x1xf32, #tpu.memory_space<vmem>>, vector<32x1xf32>,
        %c0_28 = arith.constant 0 : index
        %c0_29 = arith.constant 0 : index
        %63 = vector.load %arg11[%c0_28, %c0_29] : memref<32x1xf32, #tpu.memory_space<vmem>>, vector<32x1xf32>
        %64 = arith.mulf %51, %51 : vector<32x128xf32>
        %cst_30 = arith.constant dense<0.000000e+00> : vector<32xf32>
        %65 = vector.multi_reduction <add>, %64, %cst_30 [1] : vector<32x128xf32> to vector<32xf32>
        %66 = vector.shape_cast %65 : vector<32xf32> to vector<32x1xf32>
        %67 = arith.addf %63, %66 : vector<32x1xf32>
        %c0_31 = arith.constant 0 : index
        %c0_32 = arith.constant 0 : index
        %68 = vector.load %arg11[%c0_31, %c0_32] : memref<32x1xf32, #tpu.memory_space<vmem>>, vector<32x1xf32>
        tpu.vector_store %arg11[%c0_31, %c0_32], %67 {strides = array<i32>} : memref<32x1xf32, #tpu.memory_space<vmem>>, vector<32x1xf32>,
      } else {
      }
      %c2_i32_21 = arith.constant 2 : i32
      %55 = arith.cmpi eq, %arg0, %c2_i32_21 : i32
      %56 = arith.extui %55 : i1 to i32
      %c0_i32_22 = arith.constant 0 : i32
      %57 = arith.cmpi ne, %56, %c0_i32_22 : i32
      scf.if %57 {
        %c0_23 = arith.constant 0 : index
        %c0_24 = arith.constant 0 : index
        %58 = vector.load %arg10[%c0_23, %c0_24] : memref<32x1xf32, #tpu.memory_space<vmem>>, vector<32x1xf32>
        %59 = vector.broadcast %58 : vector<32x1xf32> to vector<32x128xf32>
        %60 = arith.mulf %51, %59 : vector<32x128xf32>
        %c0_25 = arith.constant 0 : index
        %c0_26 = arith.constant 0 : index
        %61 = vector.load %arg11[%c0_25, %c0_26] : memref<32x1xf32, #tpu.memory_space<vmem>>, vector<32x1xf32>
        %62 = vector.broadcast %61 : vector<32x1xf32> to vector<32x128xf32>
        %63 = arith.addf %60, %62 : vector<32x128xf32>
        %c0_27 = arith.constant 0 : index
        %c0_28 = arith.constant 0 : index
        %64 = vector.load %arg6[%c0_27, %c0_28] : memref<1x32xf32, #tpu.memory_space<vmem>>, vector<1x32xf32>
        %cst_29 = arith.constant dense<0.000000e+00> : vector<1x128xf32>
        %65 = tpu.matmul %64, %63, %cst_29 {dimension_numbers = #tpu.dot_dimension_numbers<[1], [0], [0], [1], [0, 0, 1, 1], [], []>, precision = #tpu.contract_precision<fp32>} : vector<1x32xf32>, vector<32x128xf32>, vector<1x128xf32> -> vector<1x128xf32>
        %c0_30 = arith.constant 0 : index
        %c0_31 = arith.constant 0 : index
        %c0_32 = arith.constant 0 : index
        %66 = vector.load %arg7[%c0_30, %c0_31, %c0_32] : memref<1x1x128xf32, #tpu.memory_space<vmem>>, vector<1x1x128xf32>
        %67 = vector.shape_cast %66 : vector<1x1x128xf32> to vector<1x128xf32>
        %68 = vector.shape_cast %65 : vector<1x128xf32> to vector<1x1x128xf32>
        tpu.vector_store %arg7[%c0_30, %c0_31, %c0_32], %68 {strides = array<i32>} : memref<1x1x128xf32, #tpu.memory_space<vmem>>, vector<1x1x128xf32>,
      } else {
      }
    } else {
    }
    return
  }
  func.func @transform_0(%arg0: i32, %arg1: i32) -> (i32, i32) {
    %c0_i32 = arith.constant 0 : i32
    %c0_i32_0 = arith.constant 0 : i32
    return %c0_i32, %arg1 : i32, i32
  }
  func.func @transform_1(%arg0: i32, %arg1: i32) -> (i32, i32) {
    %c0_i32 = arith.constant 0 : i32
    %c0_i32_0 = arith.constant 0 : i32
    %c0_i32_1 = arith.constant 0 : i32
    return %c0_i32, %c0_i32_0 : i32, i32
  }
  func.func @transform_2(%arg0: i32, %arg1: i32) -> (i32, i32) {
    %c0_i32 = arith.constant 0 : i32
    %c0_i32_0 = arith.constant 0 : i32
    %c0_i32_1 = arith.constant 0 : i32
    return %c0_i32, %c0_i32_0 : i32, i32
  }
  func.func @transform_3(%arg0: i32, %arg1: i32) -> (i32, i32) {
    %c0_i32 = arith.constant 0 : i32
    %c0_i32_0 = arith.constant 0 : i32
    %c0_i32_1 = arith.constant 0 : i32
    return %c0_i32, %c0_i32_0 : i32, i32
  }
  func.func @transform_4(%arg0: i32, %arg1: i32) -> (i32, i32) {
    %c0_i32 = arith.constant 0 : i32
    %c0_i32_0 = arith.constant 0 : i32
    %c0_i32_1 = arith.constant 0 : i32
    return %c0_i32, %c0_i32_0 : i32, i32
  }
  func.func @transform_5(%arg0: i32, %arg1: i32) -> (i32, i32, i32) {
    %c0_i32 = arith.constant 0 : i32
    %c0_i32_0 = arith.constant 0 : i32
    return %arg0, %c0_i32, %arg1 : i32, i32, i32
  }
}

</mosaic_0001>

<llo_original>
// kernel: tpu_custom_call.1
$region0: #{tpu_custom_call.1}
  #allocation0 [shape = 'u32[]', space=smem, size = 0x4, offset = 0x4, fixed_abs, tag = 'smem constant byte address 0x4 - core index']
  #allocation1 [shape = 'u32[144,128]{1,0:T(1,128)}', space=vmem, size = 0x12000, scoped, tag = 'internal scratch']
  #allocation2 [shape = 'f32[32,1]{1,0:T(8,128)}', space=vmem, size = 0x4000, scoped, tag = 'scratch operand']
  #allocation3 [shape = 'f32[32,1]{1,0:T(8,128)}', space=vmem, size = 0x4000, scoped, tag = 'scratch operand']
  #allocation4 [shape = 'f32[32,1]{1,0:T(8,128)}', space=vmem, size = 0x4000, scoped, tag = 'scratch operand']
  #allocation5 [shape = 'f32[32,1]{1,0:T(8,128)}', space=vmem, size = 0x4000, scoped, tag = 'scratch operand']
  %s0 = inlined_call_operand.vmem [shape: f32[2,128], index: 0, kind: input, shape index: {}]
  %s1 = inlined_call_operand.vmem [shape: f32[32,2], index: 1, kind: input, shape index: {}]
  %s2 = inlined_call_operand.vmem [shape: f32[32,4], index: 2, kind: input, shape index: {}]
  %s3 = inlined_call_operand.vmem [shape: f32[32,32], index: 3, kind: input, shape index: {}]
  %s4 = inlined_call_operand.vmem [shape: f32[1,32], index: 4, kind: input, shape index: {}]
  %s5 = inlined_call_operand.hbm [shape: f32[3,1,128], index: 5, kind: output, shape index: {}]
  %s6 = sld [smem:[#allocation0]]
  $region81: #{tpu_custom_call.1} parent=0
    _
  %s8 = ssub.s32 1, %s6
  %s9 = scalar_select 0, %s8, %s6
  $region1: #{tpu_custom_call.1} parent=0
    #allocation6 [shape = 'u8[1024]{0}', space=vmem, size = 0x400, scoped, tag = 'output window, operand 0']
    #allocation7 [shape = 's32[2]{0}', space=sflag, size = 0x8, scoped, tag = 'scoped memory for tpu_custom_call.1']
    %10 = vsyncpa [#allocation7], 0
    %s11 = scalar_lea.sflag [#allocation7], 1
    %12 = vsyncpa %s11, 0
    loop: start=0, step=1, limit=5
    $region2: #{tpu_custom_call.1} parent=1 // loop_pre_header
      _
    $region3: #{tpu_custom_call.1} parent=1 // loop_header
      %s14 = sphi 0, %s18
      %p15 = scmp.ge.s32.totalorder %s14, 5
      %s21 = sphi 0, %s33
      %s22 = sphi 0, %s29
      %s23 = sphi 0, %s21
      %s24 = sphi 0, %s22
      %s25 = sphi 0, %s23
      %s26 = sphi 0, %s24
      %s36 = sphi 0, %s38
      %s39 = sphi 0, %s36
      %s40 = sphi 0, %s39
      %s56 = sphi 0, %s40
      %s60 = sphi 0, %s60
      %s62 = sphi 0, %s60
      %s63 = sphi 0, %s62
      %s77 = sphi 0, %s63
      %s81 = sphi 0, %s81
      %s83 = sphi 0, %s81
      %s84 = sphi 0, %s83
      %s98 = sphi 0, %s84
      %s102 = sphi 0, %s102
      %s104 = sphi 0, %s102
      %s105 = sphi 0, %s104
      %s119 = sphi 0, %s105
      %s123 = sphi 0, %s123
      %s125 = sphi 0, %s123
      %s126 = sphi 0, %s125
      %s140 = sphi 0, %s126
      %s148 = sphi 0, %s150
      %s151 = sphi 0, %s148
      %s152 = sphi 0, %s151
      %s168 = sphi 0, %s152
    $region4: #{tpu_custom_call.1} parent=1 // loop_header_branch
      %17 = sbr.rel (%p15) target = $region8
    $region5: #{tpu_custom_call.1} parent=1 // loop_body
      %s19 = ssub.s32 %s14, 1
      %s20 = ssub.s32 %s14, 2
      %s27 = sadd.s32 1, %s22
      %p28 = scmp.ge.s32.totalorder %s27, 1
      %s29 = scalar_select %p28, 0, %s27
      %s30 = sadd.s32 1, %s21
      %s31 = scalar_select %p28, %s30, %s21
      %p32 = scmp.ge.s32.totalorder %s31, 3
      %s33 = scalar_select %p32, 0, %s31
      %s34 = ssub.s32 %s22, %s29
      %p35 = scmp.eq.s32.totalorder %s34, 0
      %s37 = sadd.s32 %s36, 1
      %s38 = scalar_select %p35, %s36, %s37
      %p41 = pneg %p35
      %p42 = scmp.eq.s32.totalorder %s14, 2
      %p43 = por %p41, %p42
      %p44 = scmp.ne.s32.totalorder %s36, %s39
      %p45 = scmp.eq.s32.totalorder %s14, 0
      %p46 = por %p44, %p45
      %p47 = scmp.ne.s32.totalorder %s36, %s39
      %p48 = scmp.eq.s32.totalorder %s19, 2
      %p49 = por %p47, %p48
      %p50 = scmp.ne.s32.totalorder %s39, %s40
      %p51 = scmp.eq.s32.totalorder %s19, 0
      %p52 = por %p50, %p51
      %p53 = scmp.ne.s32.totalorder %s39, %s40
      %p54 = scmp.eq.s32.totalorder %s20, 2
      %p55 = por %p53, %p54
      %p57 = scmp.ne.s32.totalorder %s40, %s56
      %p58 = scmp.eq.s32.totalorder %s20, 0
      %p59 = por %p57, %p58
      %s61 = sadd.s32 %s60, 1
      %p64 = scmp.eq.s32.totalorder %s14, 2
      %p65 = scmp.ne.s32.totalorder %s60, %s62
      %p66 = scmp.eq.s32.totalorder %s14, 0
      %p67 = por %p65, %p66
      %p68 = scmp.ne.s32.totalorder %s60, %s62
      %p69 = scmp.eq.s32.totalorder %s19, 2
      %p70 = por %p68, %p69
      %p71 = scmp.ne.s32.totalorder %s62, %s63
      %p72 = scmp.eq.s32.totalorder %s19, 0
      %p73 = por %p71, %p72
      %p74 = scmp.ne.s32.totalorder %s62, %s63
      %p75 = scmp.eq.s32.totalorder %s20, 2
      %p76 = por %p74, %p75
      %p78 = scmp.ne.s32.totalorder %s63, %s77
      %p79 = scmp.eq.s32.totalorder %s20, 0
      %p80 = por %p78, %p79
      %s82 = sadd.s32 %s81, 1
      %p85 = scmp.eq.s32.totalorder %s14, 2
      %p86 = scmp.ne.s32.totalorder %s81, %s83
      %p87 = scmp.eq.s32.totalorder %s14, 0
      %p88 = por %p86, %p87
      %p89 = scmp.ne.s32.totalorder %s81, %s83
      %p90 = scmp.eq.s32.totalorder %s19, 2
      %p91 = por %p89, %p90
      %p92 = scmp.ne.s32.totalorder %s83, %s84
      %p93 = scmp.eq.s32.totalorder %s19, 0
      %p94 = por %p92, %p93
      %p95 = scmp.ne.s32.totalorder %s83, %s84
      %p96 = scmp.eq.s32.totalorder %s20, 2
      %p97 = por %p95, %p96
      %p99 = scmp.ne.s32.totalorder %s84, %s98
      %p100 = scmp.eq.s32.totalorder %s20, 0
      %p101 = por %p99, %p100
      %s103 = sadd.s32 %s102, 1
      %p106 = scmp.eq.s32.totalorder %s14, 2
      %p107 = scmp.ne.s32.totalorder %s102, %s104
      %p108 = scmp.eq.s32.totalorder %s14, 0
      %p109 = por %p107, %p108
      %p110 = scmp.ne.s32.totalorder %s102, %s104
      %p111 = scmp.eq.s32.totalorder %s19, 2
      %p112 = por %p110, %p111
      %p113 = scmp.ne.s32.totalorder %s104, %s105
      %p114 = scmp.eq.s32.totalorder %s19, 0
      %p115 = por %p113, %p114
      %p116 = scmp.ne.s32.totalorder %s104, %s105
      %p117 = scmp.eq.s32.totalorder %s20, 2
      %p118 = por %p116, %p117
      %p120 = scmp.ne.s32.totalorder %s105, %s119
      %p121 = scmp.eq.s32.totalorder %s20, 0
      %p122 = por %p120, %p121
      %s124 = sadd.s32 %s123, 1
      %p127 = scmp.eq.s32.totalorder %s14, 2
      %p128 = scmp.ne.s32.totalorder %s123, %s125
      %p129 = scmp.eq.s32.totalorder %s14, 0
      %p130 = por %p128, %p129
      %p131 = scmp.ne.s32.totalorder %s123, %s125
      %p132 = scmp.eq.s32.totalorder %s19, 2
      %p133 = por %p131, %p132
      %p134 = scmp.ne.s32.totalorder %s125, %s126
      %p135 = scmp.eq.s32.totalorder %s19, 0
      %p136 = por %p134, %p135
      %p137 = scmp.ne.s32.totalorder %s125, %s126
      %p138 = scmp.eq.s32.totalorder %s20, 2
      %p139 = por %p137, %p138
      %p141 = scmp.ne.s32.totalorder %s126, %s140
      %p142 = scmp.eq.s32.totalorder %s20, 0
      %p143 = por %p141, %p142
      %s144 = ssub.s32 %s21, %s33
      %s145 = ssub.s32 %s22, %s29
      %s146 = sor.u32 %s144, %s145
      %p147 = scmp.eq.s32.totalorder %s146, 0
      %s149 = sadd.s32 %s148, 1
      %s150 = scalar_select %p147, %s148, %s149
      %p153 = pneg %p147
      %p154 = scmp.eq.s32.totalorder %s14, 2
      %p155 = por %p153, %p154
      %p156 = scmp.ne.s32.totalorder %s148, %s151
      %p157 = scmp.eq.s32.totalorder %s14, 0
      %p158 = por %p156, %p157
      %p159 = scmp.ne.s32.totalorder %s148, %s151
      %p160 = scmp.eq.s32.totalorder %s19, 2
      %p161 = por %p159, %p160
      %p162 = scmp.ne.s32.totalorder %s151, %s152
      %p163 = scmp.eq.s32.totalorder %s19, 0
      %p164 = por %p162, %p163
      %p165 = scmp.ne.s32.totalorder %s151, %s152
      %p166 = scmp.eq.s32.totalorder %s20, 2
      %p167 = por %p165, %p166
      %p169 = scmp.ne.s32.totalorder %s152, %s168
      %p170 = scmp.eq.s32.totalorder %s20, 0
      %p171 = por %p169, %p170
      %p172 = scmp.le.s32.totalorder 1, %s14
      %p173 = scmp.lt.s32.totalorder %s14, 4
      %p174 = pnand %p172, %p173
      %p175 = pneg %p174
      // Predicated region
      $region9: #{tpu_custom_call.1} parent=5 // pred_check
        _
      $region10: #{tpu_custom_call.1} parent=5 // pred_check_branch
        %177 = sbr.rel (%p174) target = $region12
      $region11: #{tpu_custom_call.1} parent=5 // pred_region
        %s178 = ssub.s32 %s14, 1
        // Predicated region
        $region13: #{tpu_custom_call.1} parent=11 // pred_check
          %p179 = pneg %p52
        $region14: #{tpu_custom_call.1} parent=11 // pred_check_branch
          %181 = sbr.rel (%p179) target = $region16
        $region15: #{tpu_custom_call.1} parent=11 // pred_region
          %p182 = scmp.lt.s32.totalorder %s24, 0
          %s183 = scalar_select %p182, %s24, 0
          %s184 = smul.addr %s183, 2
          %s185 = scalar_lea.vmem %s0, %s184
        $region16: #{tpu_custom_call.1} parent=11 // pred_fallthru
          _
        // Predicated region
        $region17: #{tpu_custom_call.1} parent=11 // pred_check
          %p186 = pneg %p73
        $region18: #{tpu_custom_call.1} parent=11 // pred_check_branch
          %188 = sbr.rel (%p186) target = $region20
        $region19: #{tpu_custom_call.1} parent=11 // pred_region
          _
        $region20: #{tpu_custom_call.1} parent=11 // pred_fallthru
          _
        // Predicated region
        $region21: #{tpu_custom_call.1} parent=11 // pred_check
          %p189 = pneg %p94
        $region22: #{tpu_custom_call.1} parent=11 // pred_check_branch
          %191 = sbr.rel (%p189) target = $region24
        $region23: #{tpu_custom_call.1} parent=11 // pred_region
          _
        $region24: #{tpu_custom_call.1} parent=11 // pred_fallthru
          _
        // Predicated region
        $region25: #{tpu_custom_call.1} parent=11 // pred_check
          %p192 = pneg %p115
        $region26: #{tpu_custom_call.1} parent=11 // pred_check_branch
          %194 = sbr.rel (%p192) target = $region28
        $region27: #{tpu_custom_call.1} parent=11 // pred_region
          _
        $region28: #{tpu_custom_call.1} parent=11 // pred_fallthru
          _
        // Predicated region
        $region29: #{tpu_custom_call.1} parent=11 // pred_check
          %p195 = pneg %p136
        $region30: #{tpu_custom_call.1} parent=11 // pred_check_branch
          %197 = sbr.rel (%p195) target = $region32
        $region31: #{tpu_custom_call.1} parent=11 // pred_region
          _
        $region32: #{tpu_custom_call.1} parent=11 // pred_fallthru
          _
      $region12: #{tpu_custom_call.1} parent=5 // pred_fallthru
        _
      %p198 = scmp.lt.s32.totalorder %s14, 3
      // Predicated region
      $region33: #{tpu_custom_call.1} parent=5 // pred_check
        %p199 = pneg %p198
      $region34: #{tpu_custom_call.1} parent=5 // pred_check_branch
        %201 = sbr.rel (%p199) target = $region36
      $region35: #{tpu_custom_call.1} parent=5 // pred_region
        _
      $region36: #{tpu_custom_call.1} parent=5 // pred_fallthru
        _
      %p202 = scmp.le.s32.totalorder 1, %s14
      %p203 = scmp.lt.s32.totalorder %s14, 4
      %p204 = pnand %p202, %p203
      %p205 = pneg %p204
      // Predicated region
      $region37: #{tpu_custom_call.1} parent=5 // pred_check
        _
      $region38: #{tpu_custom_call.1} parent=5 // pred_check_branch
        %207 = sbr.rel (%p204) target = $region40
      $region39: #{tpu_custom_call.1} parent=5 // pred_region
        %s208 = ssub.s32 %s14, 1
        %p209 = scmp.lt.s32.totalorder %s24, 0
        %s210 = scalar_select %p209, %s24, 0
        %s211 = smul.addr %s210, 2
        %s212 = scalar_lea.vmem %s0, %s211
        %p213 = pneg %p52
        %p214 = pneg %p49
        %p215 = pneg %p73
        %p216 = pneg %p70
        %p217 = pneg %p94
        %p218 = pneg %p91
        %p219 = pneg %p115
        %p220 = pneg %p112
        %p221 = pneg %p136
        %p222 = pneg %p133
        %p223 = pneg %p164
        %p224 = pneg %p161
        %s225 = sand.u32 %s151, 1
        %s226 = scalar_lea.sflag [#allocation7], %s225
        %s227 = sand.u32 %s151, 1
        %s228 = scalar_lea.vmem [#allocation6], %s227
        %p229 = scmp.lt.s32.totalorder %s24, 0
        %s230 = scalar_select %p229, %s24, 0
        %s231 = smul.addr %s230, 2
        %s232 = scalar_lea.vmem %s0, %s231
        %p233 = scmp.eq.s32.totalorder %s23, 0
        %p234 = scmp.eq.s32.totalorder %s24, 0
        %p235 = pnand %p233, %p234
        %p236 = pneg %p235
        // Predicated region
        $region41: #{tpu_custom_call.1} parent=39 // pred_check
          _
        $region42: #{tpu_custom_call.1} parent=39 // pred_check_branch
          %238 = sbr.rel (%p235) target = $region44
        $region43: #{tpu_custom_call.1} parent=39 // pred_region
          %vm239 = vcmask 7168
          %240 = vst.msk [vmem:[#allocation2] sm:$0xff] %vm239, 0.0
          %241 = vst.msk [vmem:[#allocation2 + $0x8] sm:$0xff] %vm239, 0.0
          %242 = vst.msk [vmem:[#allocation2 + $0x10] sm:$0xff] %vm239, 0.0
          %243 = vst.msk [vmem:[#allocation2 + $0x18] sm:$0xff] %vm239, 0.0
          %244 = vst.msk [vmem:[#allocation3] sm:$0xff] %vm239, 0.0
          %245 = vst.msk [vmem:[#allocation3 + $0x8] sm:$0xff] %vm239, 0.0
          %246 = vst.msk [vmem:[#allocation3 + $0x10] sm:$0xff] %vm239, 0.0
          %247 = vst.msk [vmem:[#allocation3 + $0x18] sm:$0xff] %vm239, 0.0
          %248 = vst.msk [vmem:[#allocation4] sm:$0xff] %vm239, 0.0
          %249 = vst.msk [vmem:[#allocation4 + $0x8] sm:$0xff] %vm239, 0.0
          %250 = vst.msk [vmem:[#allocation4 + $0x10] sm:$0xff] %vm239, 0.0
          %251 = vst.msk [vmem:[#allocation4 + $0x18] sm:$0xff] %vm239, 0.0
          %252 = vst.msk [vmem:[#allocation5] sm:$0xff] %vm239, 0.0
          %253 = vst.msk [vmem:[#allocation5 + $0x8] sm:$0xff] %vm239, 0.0
          %254 = vst.msk [vmem:[#allocation5 + $0x10] sm:$0xff] %vm239, 0.0
          %255 = vst.msk [vmem:[#allocation5 + $0x18] sm:$0xff] %vm239, 0.0
        $region44: #{tpu_custom_call.1} parent=39 // pred_fallthru
          _
        %v256 = vlaneseq
        %v257 = vand.u32 %v256, 127
        %s258 = smul.u32 %s24, 128
        %v259 = vstv %s258
        %v260 = vadd.s32 %v257, %v259
        %vm261 = vcmp.lt.s32.totalorder %v260, 8
        %v262 = vsel %vm261, 1, 0
        %v263 = vcvt.s32.f32 %v262
        %v264 = vld [vmem:[%s232] sm:$0x3]
        %v265 = vld [vmem:[%s1] sm:$0xff]
        %v266 = vld [vmem:[%s1 + $0x8] sm:$0xff]
        %v267 = vld [vmem:[%s1 + $0x10] sm:$0xff]
        %v268 = vld [vmem:[%s1 + $0x18] sm:$0xff]
        %270 = vset.pattern.permute.xlu0 0
        %271 = vperm.xlu0 %270, %v265
        %v272 = vpop.permute.xlu0 %271
        %275 = vset.pattern.permute.xlu0 0
        %276 = vperm.xlu0 %275, %v266
        %v277 = vpop.permute.xlu0 %276
        %280 = vset.pattern.permute.xlu0 0
        %281 = vperm.xlu0 %280, %v267
        %v282 = vpop.permute.xlu0 %281
        %285 = vset.pattern.permute.xlu0 0
        %286 = vperm.xlu0 %285, %v268
        %v287 = vpop.permute.xlu0 %286
        %v289 = vlaneseq
        %v290 = vshrl.u32 %v289, 7
        %v291 = vsub.s32 0, %v290
        %v292 = vrot.slane %v264, %v291
        %v293 = vmul.f32 %v272, %v292
        %v294 = vmul.f32 %v277, %v292
        %v295 = vmul.f32 %v282, %v292
        %v296 = vmul.f32 %v287, %v292
        %297 = vset.pattern.permute.xlu0 1
        %298 = vperm.xlu0 %297, %v265
        %v299 = vpop.permute.xlu0 %298
        %301 = vset.pattern.permute.xlu0 1
        %302 = vperm.xlu0 %301, %v266
        %v303 = vpop.permute.xlu0 %302
        %305 = vset.pattern.permute.xlu0 1
        %306 = vperm.xlu0 %305, %v267
        %v307 = vpop.permute.xlu0 %306
        %309 = vset.pattern.permute.xlu0 1
        %310 = vperm.xlu0 %309, %v268
        %v311 = vpop.permute.xlu0 %310
        %v313 = vlaneseq
        %v314 = vshrl.u32 %v313, 7
        %v315 = vsub.s32 1, %v314
        %v316 = vrot.slane %v264, %v315
        %v317 = vmul.f32 %v299, %v316
        %v318 = vmul.f32 %v303, %v316
        %v319 = vmul.f32 %v307, %v316
        %v320 = vmul.f32 %v311, %v316
        %v321 = vadd.f32 %v293, %v317
        %v322 = vadd.f32 %v294, %v318
        %v323 = vadd.f32 %v295, %v319
        %v324 = vadd.f32 %v296, %v320
        // Predicated region
        $region45: #{tpu_custom_call.1} parent=39 // pred_check
          %p325 = pneg %p233
        $region46: #{tpu_custom_call.1} parent=39 // pred_check_branch
          %327 = sbr.rel (%p325) target = $region48
        $region47: #{tpu_custom_call.1} parent=39 // pred_region
          %v328 = vld [vmem:[#allocation2] sm:$0xff]
          %v329 = vld [vmem:[#allocation2 + $0x8] sm:$0xff]
          %v330 = vld [vmem:[#allocation2 + $0x10] sm:$0xff]
          %v331 = vld [vmem:[#allocation2 + $0x18] sm:$0xff]
          %332 = vadd.xlane.f32.xlu0 %v321
          %v333 = vpop.xlane.xlu0 %332
          %334 = vadd.xlane.f32.xlu0 %v322
          %v335 = vpop.xlane.xlu0 %334
          %336 = vadd.xlane.f32.xlu0 %v323
          %v337 = vpop.xlane.xlu0 %336
          %338 = vadd.xlane.f32.xlu0 %v324
          %v339 = vpop.xlane.xlu0 %338
          %v340 = vadd.f32 %v328, %v333
          %v341 = vadd.f32 %v329, %v335
          %v342 = vadd.f32 %v330, %v337
          %v343 = vadd.f32 %v331, %v339
          %vm344 = vcmask 7168
          %345 = vst.msk [vmem:[#allocation2] sm:$0xff] %vm344, %v340
          %346 = vst.msk [vmem:[#allocation2 + $0x8] sm:$0xff] %vm344, %v341
          %347 = vst.msk [vmem:[#allocation2 + $0x10] sm:$0xff] %vm344, %v342
          %348 = vst.msk [vmem:[#allocation2 + $0x18] sm:$0xff] %vm344, %v343
          %v349 = vld [vmem:[#allocation3] sm:$0xff]
          %v350 = vld [vmem:[#allocation3 + $0x8] sm:$0xff]
          %v351 = vld [vmem:[#allocation3 + $0x10] sm:$0xff]
          %v352 = vld [vmem:[#allocation3 + $0x18] sm:$0xff]
          %v353 = vmul.f32 %v321, %v321
          %v354 = vmul.f32 %v322, %v322
          %v355 = vmul.f32 %v323, %v323
          %v356 = vmul.f32 %v324, %v324
          %357 = vadd.xlane.f32.xlu0 %v353
          %v358 = vpop.xlane.xlu0 %357
          %359 = vadd.xlane.f32.xlu0 %v354
          %v360 = vpop.xlane.xlu0 %359
          %361 = vadd.xlane.f32.xlu0 %v355
          %v362 = vpop.xlane.xlu0 %361
          %363 = vadd.xlane.f32.xlu0 %v356
          %v364 = vpop.xlane.xlu0 %363
          %v365 = vadd.f32 %v349, %v358
          %v366 = vadd.f32 %v350, %v360
          %v367 = vadd.f32 %v351, %v362
          %v368 = vadd.f32 %v352, %v364
          %369 = vst.msk [vmem:[#allocation3] sm:$0xff] %vm344, %v365
          %370 = vst.msk [vmem:[#allocation3 + $0x8] sm:$0xff] %vm344, %v366
          %371 = vst.msk [vmem:[#allocation3 + $0x10] sm:$0xff] %vm344, %v367
          %372 = vst.msk [vmem:[#allocation3 + $0x18] sm:$0xff] %vm344, %v368
        $region48: #{tpu_custom_call.1} parent=39 // pred_fallthru
          _
        %p373 = scmp.eq.s32.totalorder %s23, 1
        %p374 = pnand %p373, %p234
        %p375 = pneg %p374
        // Predicated region
        $region49: #{tpu_custom_call.1} parent=39 // pred_check
          _
        $region50: #{tpu_custom_call.1} parent=39 // pred_check_branch
          %377 = sbr.rel (%p374) target = $region52
        $region51: #{tpu_custom_call.1} parent=39 // pred_region
          %v378 = vld [vmem:[#allocation2] sm:$0xff]
          %v379 = vld [vmem:[#allocation2 + $0x8] sm:$0xff]
          %v380 = vld [vmem:[#allocation2 + $0x10] sm:$0xff]
          %v381 = vld [vmem:[#allocation2 + $0x18] sm:$0xff]
          %v382 = vmul.f32 %v378, 0.125
          %v383 = vmul.f32 %v379, 0.125
          %v384 = vmul.f32 %v380, 0.125
          %v385 = vmul.f32 %v381, 0.125
          %v386 = vld [vmem:[#allocation3] sm:$0xff]
          %v387 = vld [vmem:[#allocation3 + $0x8] sm:$0xff]
          %v388 = vld [vmem:[#allocation3 + $0x10] sm:$0xff]
          %v389 = vld [vmem:[#allocation3 + $0x18] sm:$0xff]
          %v390 = vmul.f32 %v386, 0.125
          %v391 = vmul.f32 %v387, 0.125
          %v392 = vmul.f32 %v388, 0.125
          %v393 = vmul.f32 %v389, 0.125
          %v394 = vmul.f32 %v382, %v382
          %v395 = vmul.f32 %v383, %v383
          %v396 = vmul.f32 %v384, %v384
          %v397 = vmul.f32 %v385, %v385
          %v398 = vsub.f32 %v390, %v394
          %v399 = vsub.f32 %v391, %v395
          %v400 = vsub.f32 %v392, %v396
          %v401 = vsub.f32 %v393, %v397
          %v402 = vmax.f32 %v398, 0.0
          %v403 = vmax.f32 %v399, 0.0
          %v404 = vmax.f32 %v400, 0.0
          %v405 = vmax.f32 %v401, 0.0
          %v406 = vld [vmem:[%s2] sm:$0xff]
          %v407 = vld [vmem:[%s2 + $0x8] sm:$0xff]
          %v408 = vld [vmem:[%s2 + $0x10] sm:$0xff]
          %v409 = vld [vmem:[%s2 + $0x18] sm:$0xff]
          %v410 = vadd.f32 %v402, 1e-05
          %v411 = vadd.f32 %v403, 1e-05
          %v412 = vadd.f32 %v404, 1e-05
          %v413 = vadd.f32 %v405, 1e-05
          %v414 = vrsqrt.pop %v410
          %v415 = vrsqrt.pop %v411
          %v416 = vrsqrt.pop %v412
          %v417 = vrsqrt.pop %v413
          %v418 = vmul.f32 %v406, %v414
          %v419 = vmul.f32 %v407, %v415
          %v420 = vmul.f32 %v408, %v416
          %v421 = vmul.f32 %v409, %v417
          %vm422 = vcmask 7168
          %423 = vst.msk [vmem:[#allocation2] sm:$0xff] %vm422, %v418
          %424 = vst.msk [vmem:[#allocation2 + $0x8] sm:$0xff] %vm422, %v419
          %425 = vst.msk [vmem:[#allocation2 + $0x10] sm:$0xff] %vm422, %v420
          %426 = vst.msk [vmem:[#allocation2 + $0x18] sm:$0xff] %vm422, %v421
          %v427 = vld [vmem:[%s2] sm:$0xff]
          %v428 = vld [vmem:[%s2 + $0x8] sm:$0xff]
          %v429 = vld [vmem:[%s2 + $0x10] sm:$0xff]
          %v430 = vld [vmem:[%s2 + $0x18] sm:$0xff]
          %v431 = vmul.f32 %v382, %v418
          %v432 = vmul.f32 %v383, %v419
          %v433 = vmul.f32 %v384, %v420
          %v434 = vmul.f32 %v385, %v421
          %439 = vrot.lane.b32.xlu0 %v431, 1
          %v440 = vpop.permute.xlu0 %439
          %441 = vrot.lane.b32.xlu0 %v432, 1
          %v442 = vpop.permute.xlu0 %441
          %443 = vrot.lane.b32.xlu0 %v433, 1
          %v444 = vpop.permute.xlu0 %443
          %445 = vrot.lane.b32.xlu0 %v434, 1
          %v446 = vpop.permute.xlu0 %445
          %v451 = vsub.f32 %v427, %v440
          %v452 = vsub.f32 %v428, %v442
          %v453 = vsub.f32 %v429, %v444
          %v454 = vsub.f32 %v430, %v446
          %459 = vrot.lane.b32.xlu0 %v451, 127
          %v460 = vpop.permute.xlu0 %459
          %461 = vrot.lane.b32.xlu0 %v452, 127
          %v462 = vpop.permute.xlu0 %461
          %463 = vrot.lane.b32.xlu0 %v453, 127
          %v464 = vpop.permute.xlu0 %463
          %465 = vrot.lane.b32.xlu0 %v454, 127
          %v466 = vpop.permute.xlu0 %465
          %471 = vst.msk [vmem:[#allocation3] sm:$0xff] %vm422, %v460
          %472 = vst.msk [vmem:[#allocation3 + $0x8] sm:$0xff] %vm422, %v462
          %473 = vst.msk [vmem:[#allocation3 + $0x10] sm:$0xff] %vm422, %v464
          %474 = vst.msk [vmem:[#allocation3 + $0x18] sm:$0xff] %vm422, %v466
        $region52: #{tpu_custom_call.1} parent=39 // pred_fallthru
          _
        %p475 = scmp.eq.s32.totalorder %s23, 2
        %p476 = pnand %p475, %p234
        %p477 = pneg %p476
        // Predicated region
        $region53: #{tpu_custom_call.1} parent=39 // pred_check
          _
        $region54: #{tpu_custom_call.1} parent=39 // pred_check_branch
          %479 = sbr.rel (%p476) target = $region56
        $region55: #{tpu_custom_call.1} parent=39 // pred_region
          %v480 = vld [vmem:[#allocation4] sm:$0xff]
          %v481 = vld [vmem:[#allocation4 + $0x8] sm:$0xff]
          %v482 = vld [vmem:[#allocation4 + $0x10] sm:$0xff]
          %v483 = vld [vmem:[#allocation4 + $0x18] sm:$0xff]
          %v484 = vmul.f32 %v480, 0.125
          %v485 = vmul.f32 %v481, 0.125
          %v486 = vmul.f32 %v482, 0.125
          %v487 = vmul.f32 %v483, 0.125
          %v488 = vld [vmem:[#allocation5] sm:$0xff]
          %v489 = vld [vmem:[#allocation5 + $0x8] sm:$0xff]
          %v490 = vld [vmem:[#allocation5 + $0x10] sm:$0xff]
          %v491 = vld [vmem:[#allocation5 + $0x18] sm:$0xff]
          %v492 = vmul.f32 %v488, 0.125
          %v493 = vmul.f32 %v489, 0.125
          %v494 = vmul.f32 %v490, 0.125
          %v495 = vmul.f32 %v491, 0.125
          %v496 = vmul.f32 %v484, %v484
          %v497 = vmul.f32 %v485, %v485
          %v498 = vmul.f32 %v486, %v486
          %v499 = vmul.f32 %v487, %v487
          %v500 = vsub.f32 %v492, %v496
          %v501 = vsub.f32 %v493, %v497
          %v502 = vsub.f32 %v494, %v498
          %v503 = vsub.f32 %v495, %v499
          %v504 = vmax.f32 %v500, 0.0
          %v505 = vmax.f32 %v501, 0.0
          %v506 = vmax.f32 %v502, 0.0
          %v507 = vmax.f32 %v503, 0.0
          %v508 = vld [vmem:[%s2] sm:$0xff]
          %v509 = vld [vmem:[%s2 + $0x8] sm:$0xff]
          %v510 = vld [vmem:[%s2 + $0x10] sm:$0xff]
          %v511 = vld [vmem:[%s2 + $0x18] sm:$0xff]
          %v512 = vadd.f32 %v504, 1e-05
          %v513 = vadd.f32 %v505, 1e-05
          %v514 = vadd.f32 %v506, 1e-05
          %v515 = vadd.f32 %v507, 1e-05
          %v516 = vrsqrt.pop %v512
          %v517 = vrsqrt.pop %v513
          %v518 = vrsqrt.pop %v514
          %v519 = vrsqrt.pop %v515
          %524 = vrot.lane.b32.xlu0 %v516, 2
          %v525 = vpop.permute.xlu0 %524
          %526 = vrot.lane.b32.xlu0 %v517, 2
          %v527 = vpop.permute.xlu0 %526
          %528 = vrot.lane.b32.xlu0 %v518, 2
          %v529 = vpop.permute.xlu0 %528
          %530 = vrot.lane.b32.xlu0 %v519, 2
          %v531 = vpop.permute.xlu0 %530
          %v536 = vmul.f32 %v508, %v525
          %v537 = vmul.f32 %v509, %v527
          %v538 = vmul.f32 %v510, %v529
          %v539 = vmul.f32 %v511, %v531
          %544 = vrot.lane.b32.xlu0 %v536, 126
          %v545 = vpop.permute.xlu0 %544
          %546 = vrot.lane.b32.xlu0 %v537, 126
          %v547 = vpop.permute.xlu0 %546
          %548 = vrot.lane.b32.xlu0 %v538, 126
          %v549 = vpop.permute.xlu0 %548
          %550 = vrot.lane.b32.xlu0 %v539, 126
          %v551 = vpop.permute.xlu0 %550
          %vm556 = vcmask 7168
          %557 = vst.msk [vmem:[#allocation4] sm:$0xff] %vm556, %v545
          %558 = vst.msk [vmem:[#allocation4 + $0x8] sm:$0xff] %vm556, %v547
          %559 = vst.msk [vmem:[#allocation4 + $0x10] sm:$0xff] %vm556, %v549
          %560 = vst.msk [vmem:[#allocation4 + $0x18] sm:$0xff] %vm556, %v551
          %v561 = vld [vmem:[%s2] sm:$0xff]
          %v562 = vld [vmem:[%s2 + $0x8] sm:$0xff]
          %v563 = vld [vmem:[%s2 + $0x10] sm:$0xff]
          %v564 = vld [vmem:[%s2 + $0x18] sm:$0xff]
          %v565 = vmul.f32 %v484, %v545
          %v566 = vmul.f32 %v485, %v547
          %v567 = vmul.f32 %v486, %v549
          %v568 = vmul.f32 %v487, %v551
          %573 = vrot.lane.b32.xlu0 %v565, 3
          %v574 = vpop.permute.xlu0 %573
          %575 = vrot.lane.b32.xlu0 %v566, 3
          %v576 = vpop.permute.xlu0 %575
          %577 = vrot.lane.b32.xlu0 %v567, 3
          %v578 = vpop.permute.xlu0 %577
          %579 = vrot.lane.b32.xlu0 %v568, 3
          %v580 = vpop.permute.xlu0 %579
          %v585 = vsub.f32 %v561, %v574
          %v586 = vsub.f32 %v562, %v576
          %v587 = vsub.f32 %v563, %v578
          %v588 = vsub.f32 %v564, %v580
          %593 = vrot.lane.b32.xlu0 %v585, 125
          %v594 = vpop.permute.xlu0 %593
          %595 = vrot.lane.b32.xlu0 %v586, 125
          %v596 = vpop.permute.xlu0 %595
          %597 = vrot.lane.b32.xlu0 %v587, 125
          %v598 = vpop.permute.xlu0 %597
          %599 = vrot.lane.b32.xlu0 %v588, 125
          %v600 = vpop.permute.xlu0 %599
          %605 = vst.msk [vmem:[#allocation5] sm:$0xff] %vm556, %v594
          %606 = vst.msk [vmem:[#allocation5 + $0x8] sm:$0xff] %vm556, %v596
          %607 = vst.msk [vmem:[#allocation5 + $0x10] sm:$0xff] %vm556, %v598
          %608 = vst.msk [vmem:[#allocation5 + $0x18] sm:$0xff] %vm556, %v600
        $region56: #{tpu_custom_call.1} parent=39 // pred_fallthru
          _
        %p609 = scmp.ge.s32.totalorder %s23, 1
        // Predicated region
        $region57: #{tpu_custom_call.1} parent=39 // pred_check
          %p610 = pneg %p609
        $region58: #{tpu_custom_call.1} parent=39 // pred_check_branch
          %612 = sbr.rel (%p610) target = $region60
        $region59: #{tpu_custom_call.1} parent=39 // pred_region
          %v613 = vld [vmem:[#allocation2] sm:$0xff]
          %v614 = vld [vmem:[#allocation2 + $0x8] sm:$0xff]
          %v615 = vld [vmem:[#allocation2 + $0x10] sm:$0xff]
          %v616 = vld [vmem:[#allocation2 + $0x18] sm:$0xff]
          %618 = vset.pattern.permute.xlu0 0
          %619 = vperm.xlu0 %618, %v613
          %v620 = vpop.permute.xlu0 %619
          %623 = vset.pattern.permute.xlu0 0
          %624 = vperm.xlu0 %623, %v614
          %v625 = vpop.permute.xlu0 %624
          %628 = vset.pattern.permute.xlu0 0
          %629 = vperm.xlu0 %628, %v615
          %v630 = vpop.permute.xlu0 %629
          %633 = vset.pattern.permute.xlu0 0
          %634 = vperm.xlu0 %633, %v616
          %v635 = vpop.permute.xlu0 %634
          %v637 = vmul.f32 %v321, %v620
          %v638 = vmul.f32 %v322, %v625
          %v639 = vmul.f32 %v323, %v630
          %v640 = vmul.f32 %v324, %v635
          %v641 = vld [vmem:[#allocation3] sm:$0xff]
          %v642 = vld [vmem:[#allocation3 + $0x8] sm:$0xff]
          %v643 = vld [vmem:[#allocation3 + $0x10] sm:$0xff]
          %v644 = vld [vmem:[#allocation3 + $0x18] sm:$0xff]
          %646 = vset.pattern.permute.xlu0 0
          %647 = vperm.xlu0 %646, %v641
          %v648 = vpop.permute.xlu0 %647
          %651 = vset.pattern.permute.xlu0 0
          %652 = vperm.xlu0 %651, %v642
          %v653 = vpop.permute.xlu0 %652
          %656 = vset.pattern.permute.xlu0 0
          %657 = vperm.xlu0 %656, %v643
          %v658 = vpop.permute.xlu0 %657
          %661 = vset.pattern.permute.xlu0 0
          %662 = vperm.xlu0 %661, %v644
          %v663 = vpop.permute.xlu0 %662
          %v665 = vadd.f32 %v637, %v648
          %v666 = vadd.f32 %v638, %v653
          %v667 = vadd.f32 %v639, %v658
          %v668 = vadd.f32 %v640, %v663
          %v669 = vmul.f32 %v665, %v263
          %v670 = vmul.f32 %v666, %v263
          %v671 = vmul.f32 %v667, %v263
          %v672 = vmul.f32 %v668, %v263
          %v673 = vld [vmem:[%s3] sm:$0xff]
          %v674 = vld [vmem:[%s3 + $0x8] sm:$0xff]
          %v675 = vld [vmem:[%s3 + $0x10] sm:$0xff]
          %v676 = vld [vmem:[%s3 + $0x18] sm:$0xff]
          %vm677 = vcmask 261120
          %v679 = vsel %vm677, %v673, 0
          %v682 = vsel %vm677, %v674, 0
          %v685 = vsel %vm677, %v675, 0
          %v688 = vsel %vm677, %v676, 0
          %690 = vmatprep.subr.mxu0 0.0
          %v691 = vand.u32 %v669, 4294901760
          %692 = vmatpush1.msra.mxu0 %v691
          %693 = vmatprep.subr.mxu0 0.0
          %v694 = vand.u32 %v670, 4294901760
          %695 = vmatpush1.msra.mxu0 %v694
          %696 = vmatprep.subr.mxu0 0.0
          %v697 = vand.u32 %v671, 4294901760
          %698 = vmatpush1.msra.mxu0 %v697
          %699 = vmatprep.subr.mxu0 0.0
          %v700 = vand.u32 %v672, 4294901760
          %701 = vmatpush1.msra.mxu0 %v700
          %702 = vmatprep.subr.mxu0 0.0
          %703 = vmatpush1.msra.mxu0 0.0
          %704 = vmatprep.subr.mxu0 0.0
          %705 = vmatpush1.msra.mxu0 0.0
          %706 = vmatprep.subr.mxu0 0.0
          %707 = vmatpush1.msra.mxu0 0.0
          %708 = vmatprep.subr.mxu0 0.0
          %709 = vmatpush1.msra.mxu0 0.0
          %710 = vmatprep.subr.mxu0 0.0
          %711 = vmatpush1.msra.mxu0 0.0
          %712 = vmatprep.subr.mxu0 0.0
          %713 = vmatpush1.msra.mxu0 0.0
          %714 = vmatprep.subr.mxu0 0.0
          %715 = vmatpush1.msra.mxu0 0.0
          %716 = vmatprep.subr.mxu0 0.0
          %717 = vmatpush1.msra.mxu0 0.0
          %718 = vmatprep.subr.mxu0 0.0
          %719 = vmatpush1.msra.mxu0 0.0
          %720 = vmatprep.subr.mxu0 0.0
          %721 = vmatpush1.msra.mxu0 0.0
          %722 = vmatprep.subr.mxu0 0.0
          %723 = vmatpush1.msra.mxu0 0.0
          %724 = vmatprep.subr.mxu0 0.0
          %725 = vmatpush1.msra.mxu0 0.0
          %726 = vmatprep.subr.mxu0 0.0
          %727 = vmatpush1.msra.mxu0 0.0
          %728 = vmatprep.subr.mxu0 0.0
          %729 = vmatpush1.msra.mxu0 0.0
          %730 = vmatprep.subr.mxu0 0.0
          %731 = vmatpush1.msra.mxu0 0.0
          %732 = vmatprep.subr.mxu0 0.0
          %733 = vmatpush1.msra.mxu0 0.0
          %734 = vmatprep.subr.mxu0 0.0
          %735 = vmatpush1.msra.mxu0 0.0
          %736 = vmatprep.subr.mxu0 0.0
          %737 = vmatpush1.msra.mxu0 0.0
          %738 = vmatprep.subr.mxu0 0.0
          %739 = vmatpush1.msra.mxu0 0.0
          %740 = vmatprep.subr.mxu0 0.0
          %741 = vmatpush1.msra.mxu0 0.0
          %742 = vmatprep.subr.mxu0 0.0
          %743 = vmatpush1.msra.mxu0 0.0
          %744 = vmatprep.subr.mxu0 0.0
          %745 = vmatpush1.msra.mxu0 0.0
          %746 = vmatprep.subr.mxu0 0.0
          %747 = vmatpush1.msra.mxu0 0.0
          %748 = vmatprep.subr.mxu0 0.0
          %749 = vmatpush1.msra.mxu0 0.0
          %750 = vmatprep.subr.mxu0 0.0
          %751 = vmatpush1.msra.mxu0 0.0
          %752 = vmatprep.subr.mxu0 0.0
          %753 = vmatpush1.msra.mxu0 0.0
          %754 = vmatprep.subr.mxu0 0.0
          %755 = vmatpush1.msra.mxu0 0.0
          %756 = vmatprep.subr.mxu0 0.0
          %757 = vmatpush1.msra.mxu0 0.0
          %758 = vmatprep.mubr.f32.mxu0 0.0
          %v759 = vand.u32 %v679, 4294901760
          %v760 = vsub.f32 %v679, %v759
          %v761 = vand.u32 %v760, 4294901760
          %v762 = vsub.f32 %v760, %v761
          %v763 = vand.u32 %v762, 4294901760
          %764 = vmatmul.mubr.f32.gmra.mrb[0].mxu0 %v763
          %v765 = vpop.f32.mrb[0].mxu0
          %v766 = vadd.f32 0.0, %v765
          %v767 = vpop.f32.mrb[0].mxu0
          %768 = vmatprep.mubr.f32.mxu0 0.0
          %v769 = vand.u32 %v682, 4294901760
          %v770 = vsub.f32 %v682, %v769
          %v771 = vand.u32 %v770, 4294901760
          %v772 = vsub.f32 %v770, %v771
          %v773 = vand.u32 %v772, 4294901760
          %774 = vmatmul.mubr.f32.gmra.mrb[0].mxu0 %v773
          %v775 = vpop.f32.mrb[0].mxu0
          %v776 = vadd.f32 0.0, %v775
          %v777 = vpop.f32.mrb[0].mxu0
          %778 = vmatprep.mubr.f32.mxu0 0.0
          %v779 = vand.u32 %v685, 4294901760
          %v780 = vsub.f32 %v685, %v779
          %v781 = vand.u32 %v780, 4294901760
          %v782 = vsub.f32 %v780, %v781
          %v783 = vand.u32 %v782, 4294901760
          %784 = vmatmul.mubr.f32.gmra.mrb[0].mxu0 %v783
          %v785 = vpop.f32.mrb[0].mxu0
          %v786 = vadd.f32 0.0, %v785
          %v787 = vpop.f32.mrb[0].mxu0
          %788 = vmatprep.mubr.f32.mxu0 0.0
          %v789 = vand.u32 %v688, 4294901760
          %v790 = vsub.f32 %v688, %v789
          %v791 = vand.u32 %v790, 4294901760
          %v792 = vsub.f32 %v790, %v791
          %v793 = vand.u32 %v792, 4294901760
          %794 = vmatmul.mubr.f32.gmra.mrb[0].mxu0 %v793
          %v795 = vpop.f32.mrb[0].mxu0
          %v796 = vadd.f32 0.0, %v795
          %v797 = vpop.f32.mrb[0].mxu0
          %798 = vdwg.mxu0
          %799 = vmatprep.subr.mxu0 0.0
          %v800 = vand.u32 %v669, 4294901760
          %v801 = vsub.f32 %v669, %v800
          %v802 = vand.u32 %v801, 4294901760
          %v803 = vsub.f32 %v801, %v802
          %v804 = vand.u32 %v803, 4294901760
          %805 = vmatpush1.msra.mxu0 %v804
          %806 = vmatprep.subr.mxu0 0.0
          %v807 = vand.u32 %v670, 4294901760
          %v808 = vsub.f32 %v670, %v807
          %v809 = vand.u32 %v808, 4294901760
          %v810 = vsub.f32 %v808, %v809
          %v811 = vand.u32 %v810, 4294901760
          %812 = vmatpush1.msra.mxu0 %v811
          %813 = vmatprep.subr.mxu0 0.0
          %v814 = vand.u32 %v671, 4294901760
          %v815 = vsub.f32 %v671, %v814
          %v816 = vand.u32 %v815, 4294901760
          %v817 = vsub.f32 %v815, %v816
          %v818 = vand.u32 %v817, 4294901760
          %819 = vmatpush1.msra.mxu0 %v818
          %820 = vmatprep.subr.mxu0 0.0
          %v821 = vand.u32 %v672, 4294901760
          %v822 = vsub.f32 %v672, %v821
          %v823 = vand.u32 %v822, 4294901760
          %v824 = vsub.f32 %v822, %v823
          %v825 = vand.u32 %v824, 4294901760
          %826 = vmatpush1.msra.mxu0 %v825
          %827 = vmatprep.subr.mxu0 0.0
          %828 = vmatpush1.msra.mxu0 0.0
          %829 = vmatprep.subr.mxu0 0.0
          %830 = vmatpush1.msra.mxu0 0.0
          %831 = vmatprep.subr.mxu0 0.0
          %832 = vmatpush1.msra.mxu0 0.0
          %833 = vmatprep.subr.mxu0 0.0
          %834 = vmatpush1.msra.mxu0 0.0
          %835 = vmatprep.subr.mxu0 0.0
          %836 = vmatpush1.msra.mxu0 0.0
          %837 = vmatprep.subr.mxu0 0.0
          %838 = vmatpush1.msra.mxu0 0.0
          %839 = vmatprep.subr.mxu0 0.0
          %840 = vmatpush1.msra.mxu0 0.0
          %841 = vmatprep.subr.mxu0 0.0
          %842 = vmatpush1.msra.mxu0 0.0
          %843 = vmatprep.subr.mxu0 0.0
          %844 = vmatpush1.msra.mxu0 0.0
          %845 = vmatprep.subr.mxu0 0.0
          %846 = vmatpush1.msra.mxu0 0.0
          %847 = vmatprep.subr.mxu0 0.0
          %848 = vmatpush1.msra.mxu0 0.0
          %849 = vmatprep.subr.mxu0 0.0
          %850 = vmatpush1.msra.mxu0 0.0
          %851 = vmatprep.subr.mxu0 0.0
          %852 = vmatpush1.msra.mxu0 0.0
          %853 = vmatprep.subr.mxu0 0.0
          %854 = vmatpush1.msra.mxu0 0.0
          %855 = vmatprep.subr.mxu0 0.0
          %856 = vmatpush1.msra.mxu0 0.0
          %857 = vmatprep.subr.mxu0 0.0
          %858 = vmatpush1.msra.mxu0 0.0
          %859 = vmatprep.subr.mxu0 0.0
          %860 = vmatpush1.msra.mxu0 0.0
          %861 = vmatprep.subr.mxu0 0.0
          %862 = vmatpush1.msra.mxu0 0.0
          %863 = vmatprep.subr.mxu0 0.0
          %864 = vmatpush1.msra.mxu0 0.0
          %865 = vmatprep.subr.mxu0 0.0
          %866 = vmatpush1.msra.mxu0 0.0
          %867 = vmatprep.subr.mxu0 0.0
          %868 = vmatpush1.msra.mxu0 0.0
          %869 = vmatprep.subr.mxu0 0.0
          %870 = vmatpush1.msra.mxu0 0.0
          %871 = vmatprep.subr.mxu0 0.0
          %872 = vmatpush1.msra.mxu0 0.0
          %873 = vmatprep.subr.mxu0 0.0
          %874 = vmatpush1.msra.mxu0 0.0
          %875 = vmatprep.subr.mxu0 0.0
          %876 = vmatpush1.msra.mxu0 0.0
          %877 = vmatprep.subr.mxu0 0.0
          %878 = vmatpush1.msra.mxu0 0.0
          %879 = vmatprep.subr.mxu0 0.0
          %880 = vmatpush1.msra.mxu0 0.0
          %881 = vmatprep.subr.mxu0 0.0
          %882 = vmatpush1.msra.mxu0 0.0
          %883 = vmatprep.mubr.f32.mxu0 0.0
          %v884 = vand.u32 %v679, 4294901760
          %885 = vmatmul.mubr.f32.gmra.mrb[0].mxu0 %v884
          %v886 = vpop.f32.mrb[0].mxu0
          %v887 = vadd.f32 %v766, %v886
          %v888 = vpop.f32.mrb[0].mxu0
          %889 = vmatprep.mubr.f32.mxu0 0.0
          %v890 = vand.u32 %v682, 4294901760
          %891 = vmatmul.mubr.f32.gmra.mrb[0].mxu0 %v890
          %v892 = vpop.f32.mrb[0].mxu0
          %v893 = vadd.f32 %v776, %v892
          %v894 = vpop.f32.mrb[0].mxu0
          %895 = vmatprep.mubr.f32.mxu0 0.0
          %v896 = vand.u32 %v685, 4294901760
          %897 = vmatmul.mubr.f32.gmra.mrb[0].mxu0 %v896
          %v898 = vpop.f32.mrb[0].mxu0
          %v899 = vadd.f32 %v786, %v898
          %v900 = vpop.f32.mrb[0].mxu0
          %901 = vmatprep.mubr.f32.mxu0 0.0
          %v902 = vand.u32 %v688, 4294901760
          %903 = vmatmul.mubr.f32.gmra.mrb[0].mxu0 %v902
          %v904 = vpop.f32.mrb[0].mxu0
          %v905 = vadd.f32 %v796, %v904
          %v906 = vpop.f32.mrb[0].mxu0
          %907 = vdwg.mxu0
          %908 = vmatprep.subr.mxu0 0.0
          %v909 = vand.u32 %v669, 4294901760
          %v910 = vsub.f32 %v669, %v909
          %911 = vmatpush1.msra.mxu0 %v910
          %912 = vmatprep.subr.mxu0 0.0
          %v913 = vand.u32 %v670, 4294901760
          %v914 = vsub.f32 %v670, %v913
          %915 = vmatpush1.msra.mxu0 %v914
          %916 = vmatprep.subr.mxu0 0.0
          %v917 = vand.u32 %v671, 4294901760
          %v918 = vsub.f32 %v671, %v917
          %919 = vmatpush1.msra.mxu0 %v918
          %920 = vmatprep.subr.mxu0 0.0
          %v921 = vand.u32 %v672, 4294901760
          %v922 = vsub.f32 %v672, %v921
          %923 = vmatpush1.msra.mxu0 %v922
          %924 = vmatprep.subr.mxu0 0.0
          %925 = vmatpush1.msra.mxu0 0.0
          %926 = vmatprep.subr.mxu0 0.0
          %927 = vmatpush1.msra.mxu0 0.0
          %928 = vmatprep.subr.mxu0 0.0
          %929 = vmatpush1.msra.mxu0 0.0
          %930 = vmatprep.subr.mxu0 0.0
          %931 = vmatpush1.msra.mxu0 0.0
          %932 = vmatprep.subr.mxu0 0.0
          %933 = vmatpush1.msra.mxu0 0.0
          %934 = vmatprep.subr.mxu0 0.0
          %935 = vmatpush1.msra.mxu0 0.0
          %936 = vmatprep.subr.mxu0 0.0
          %937 = vmatpush1.msra.mxu0 0.0
          %938 = vmatprep.subr.mxu0 0.0
          %939 = vmatpush1.msra.mxu0 0.0
          %940 = vmatprep.subr.mxu0 0.0
          %941 = vmatpush1.msra.mxu0 0.0
          %942 = vmatprep.subr.mxu0 0.0
          %943 = vmatpush1.msra.mxu0 0.0
          %944 = vmatprep.subr.mxu0 0.0
          %945 = vmatpush1.msra.mxu0 0.0
          %946 = vmatprep.subr.mxu0 0.0
          %947 = vmatpush1.msra.mxu0 0.0
          %948 = vmatprep.subr.mxu0 0.0
          %949 = vmatpush1.msra.mxu0 0.0
          %950 = vmatprep.subr.mxu0 0.0
          %951 = vmatpush1.msra.mxu0 0.0
          %952 = vmatprep.subr.mxu0 0.0
          %953 = vmatpush1.msra.mxu0 0.0
          %954 = vmatprep.subr.mxu0 0.0
          %955 = vmatpush1.msra.mxu0 0.0
          %956 = vmatprep.subr.mxu0 0.0
          %957 = vmatpush1.msra.mxu0 0.0
          %958 = vmatprep.subr.mxu0 0.0
          %959 = vmatpush1.msra.mxu0 0.0
          %960 = vmatprep.subr.mxu0 0.0
          %961 = vmatpush1.msra.mxu0 0.0
          %962 = vmatprep.subr.mxu0 0.0
          %963 = vmatpush1.msra.mxu0 0.0
          %964 = vmatprep.subr.mxu0 0.0
          %965 = vmatpush1.msra.mxu0 0.0
          %966 = vmatprep.subr.mxu0 0.0
          %967 = vmatpush1.msra.mxu0 0.0
          %968 = vmatprep.subr.mxu0 0.0
          %969 = vmatpush1.msra.mxu0 0.0
          %970 = vmatprep.subr.mxu0 0.0
          %971 = vmatpush1.msra.mxu0 0.0
          %972 = vmatprep.subr.mxu0 0.0
          %973 = vmatpush1.msra.mxu0 0.0
          %974 = vmatprep.subr.mxu0 0.0
          %975 = vmatpush1.msra.mxu0 0.0
          %976 = vmatprep.subr.mxu0 0.0
          %977 = vmatpush1.msra.mxu0 0.0
          %978 = vmatprep.subr.mxu0 0.0
          %979 = vmatpush1.msra.mxu0 0.0
          %980 = vmatprep.mubr.f32.mxu0 0.0
          %v981 = vand.u32 %v679, 4294901760
          %v982 = vsub.f32 %v679, %v981
          %983 = vmatmul.mubr.f32.gmra.mrb[0].mxu0 %v982
          %v984 = vpop.f32.mrb[0].mxu0
          %v985 = vadd.f32 %v887, %v984
          %v986 = vpop.f32.mrb[0].mxu0
          %987 = vmatprep.mubr.f32.mxu0 0.0
          %v988 = vand.u32 %v682, 4294901760
          %v989 = vsub.f32 %v682, %v988
          %990 = vmatmul.mubr.f32.gmra.mrb[0].mxu0 %v989
          %v991 = vpop.f32.mrb[0].mxu0
          %v992 = vadd.f32 %v893, %v991
          %v993 = vpop.f32.mrb[0].mxu0
          %994 = vmatprep.mubr.f32.mxu0 0.0
          %v995 = vand.u32 %v685, 4294901760
          %v996 = vsub.f32 %v685, %v995
          %997 = vmatmul.mubr.f32.gmra.mrb[0].mxu0 %v996
          %v998 = vpop.f32.mrb[0].mxu0
          %v999 = vadd.f32 %v899, %v998
          %v1000 = vpop.f32.mrb[0].mxu0
          %1001 = vmatprep.mubr.f32.mxu0 0.0
          %v1002 = vand.u32 %v688, 4294901760
          %v1003 = vsub.f32 %v688, %v1002
          %1004 = vmatmul.mubr.f32.gmra.mrb[0].mxu0 %v1003
          %v1005 = vpop.f32.mrb[0].mxu0
          %v1006 = vadd.f32 %v905, %v1005
          %v1007 = vpop.f32.mrb[0].mxu0
          %1008 = vdwg.mxu0
          %1009 = vmatprep.subr.mxu0 0.0
          %v1010 = vand.u32 %v669, 4294901760
          %1011 = vmatpush1.msra.mxu0 %v1010
          %1012 = vmatprep.subr.mxu0 0.0
          %v1013 = vand.u32 %v670, 4294901760
          %1014 = vmatpush1.msra.mxu0 %v1013
          %1015 = vmatprep.subr.mxu0 0.0
          %v1016 = vand.u32 %v671, 4294901760
          %1017 = vmatpush1.msra.mxu0 %v1016
          %1018 = vmatprep.subr.mxu0 0.0
          %v1019 = vand.u32 %v672, 4294901760
          %1020 = vmatpush1.msra.mxu0 %v1019
          %1021 = vmatprep.subr.mxu0 0.0
          %1022 = vmatpush1.msra.mxu0 0.0
          %1023 = vmatprep.subr.mxu0 0.0
          %1024 = vmatpush1.msra.mxu0 0.0
          %1025 = vmatprep.subr.mxu0 0.0
          %1026 = vmatpush1.msra.mxu0 0.0
          %1027 = vmatprep.subr.mxu0 0.0
          %1028 = vmatpush1.msra.mxu0 0.0
          %1029 = vmatprep.subr.mxu0 0.0
          %1030 = vmatpush1.msra.mxu0 0.0
          %1031 = vmatprep.subr.mxu0 0.0
          %1032 = vmatpush1.msra.mxu0 0.0
          %1033 = vmatprep.subr.mxu0 0.0
          %1034 = vmatpush1.msra.mxu0 0.0
          %1035 = vmatprep.subr.mxu0 0.0
          %1036 = vmatpush1.msra.mxu0 0.0
          %1037 = vmatprep.subr.mxu0 0.0
          %1038 = vmatpush1.msra.mxu0 0.0
          %1039 = vmatprep.subr.mxu0 0.0
          %1040 = vmatpush1.msra.mxu0 0.0
          %1041 = vmatprep.subr.mxu0 0.0
          %1042 = vmatpush1.msra.mxu0 0.0
          %1043 = vmatprep.subr.mxu0 0.0
          %1044 = vmatpush1.msra.mxu0 0.0
          %1045 = vmatprep.subr.mxu0 0.0
          %1046 = vmatpush1.msra.mxu0 0.0
          %1047 = vmatprep.subr.mxu0 0.0
          %1048 = vmatpush1.msra.mxu0 0.0
          %1049 = vmatprep.subr.mxu0 0.0
          %1050 = vmatpush1.msra.mxu0 0.0
          %1051 = vmatprep.subr.mxu0 0.0
          %1052 = vmatpush1.msra.mxu0 0.0
          %1053 = vmatprep.subr.mxu0 0.0
          %1054 = vmatpush1.msra.mxu0 0.0
          %1055 = vmatprep.subr.mxu0 0.0
          %1056 = vmatpush1.msra.mxu0 0.0
          %1057 = vmatprep.subr.mxu0 0.0
          %1058 = vmatpush1.msra.mxu0 0.0
          %1059 = vmatprep.subr.mxu0 0.0
          %1060 = vmatpush1.msra.mxu0 0.0
          %1061 = vmatprep.subr.mxu0 0.0
          %1062 = vmatpush1.msra.mxu0 0.0
          %1063 = vmatprep.subr.mxu0 0.0
          %1064 = vmatpush1.msra.mxu0 0.0
          %1065 = vmatprep.subr.mxu0 0.0
          %1066 = vmatpush1.msra.mxu0 0.0
          %1067 = vmatprep.subr.mxu0 0.0
          %1068 = vmatpush1.msra.mxu0 0.0
          %1069 = vmatprep.subr.mxu0 0.0
          %1070 = vmatpush1.msra.mxu0 0.0
          %1071 = vmatprep.subr.mxu0 0.0
          %1072 = vmatpush1.msra.mxu0 0.0
          %1073 = vmatprep.subr.mxu0 0.0
          %1074 = vmatpush1.msra.mxu0 0.0
          %1075 = vmatprep.subr.mxu0 0.0
          %1076 = vmatpush1.msra.mxu0 0.0
          %1077 = vmatprep.mubr.f32.mxu0 0.0
          %v1078 = vand.u32 %v679, 4294901760
          %v1079 = vsub.f32 %v679, %v1078
          %v1080 = vand.u32 %v1079, 4294901760
          %1081 = vmatmul.mubr.f32.gmra.mrb[0].mxu0 %v1080
          %v1082 = vpop.f32.mrb[0].mxu0
          %v1083 = vadd.f32 %v985, %v1082
          %v1084 = vpop.f32.mrb[0].mxu0
          %1085 = vmatprep.mubr.f32.mxu0 0.0
          %v1086 = vand.u32 %v682, 4294901760
          %v1087 = vsub.f32 %v682, %v1086
          %v1088 = vand.u32 %v1087, 4294901760
          %1089 = vmatmul.mubr.f32.gmra.mrb[0].mxu0 %v1088
          %v1090 = vpop.f32.mrb[0].mxu0
          %v1091 = vadd.f32 %v992, %v1090
          %v1092 = vpop.f32.mrb[0].mxu0
          %1093 = vmatprep.mubr.f32.mxu0 0.0
          %v1094 = vand.u32 %v685, 4294901760
          %v1095 = vsub.f32 %v685, %v1094
          %v1096 = vand.u32 %v1095, 4294901760
          %1097 = vmatmul.mubr.f32.gmra.mrb[0].mxu0 %v1096
          %v1098 = vpop.f32.mrb[0].mxu0
          %v1099 = vadd.f32 %v999, %v1098
          %v1100 = vpop.f32.mrb[0].mxu0
          %1101 = vmatprep.mubr.f32.mxu0 0.0
          %v1102 = vand.u32 %v688, 4294901760
          %v1103 = vsub.f32 %v688, %v1102
          %v1104 = vand.u32 %v1103, 4294901760
          %1105 = vmatmul.mubr.f32.gmra.mrb[0].mxu0 %v1104
          %v1106 = vpop.f32.mrb[0].mxu0
          %v1107 = vadd.f32 %v1006, %v1106
          %v1108 = vpop.f32.mrb[0].mxu0
          %1109 = vdwg.mxu0
          %1110 = vmatprep.subr.mxu0 0.0
          %v1111 = vand.u32 %v669, 4294901760
          %v1112 = vsub.f32 %v669, %v1111
          %v1113 = vand.u32 %v1112, 4294901760
          %1114 = vmatpush1.msra.mxu0 %v1113
          %1115 = vmatprep.subr.mxu0 0.0
          %v1116 = vand.u32 %v670, 4294901760
          %v1117 = vsub.f32 %v670, %v1116
          %v1118 = vand.u32 %v1117, 4294901760
          %1119 = vmatpush1.msra.mxu0 %v1118
          %1120 = vmatprep.subr.mxu0 0.0
          %v1121 = vand.u32 %v671, 4294901760
          %v1122 = vsub.f32 %v671, %v1121
          %v1123 = vand.u32 %v1122, 4294901760
          %1124 = vmatpush1.msra.mxu0 %v1123
          %1125 = vmatprep.subr.mxu0 0.0
          %v1126 = vand.u32 %v672, 4294901760
          %v1127 = vsub.f32 %v672, %v1126
          %v1128 = vand.u32 %v1127, 4294901760
          %1129 = vmatpush1.msra.mxu0 %v1128
          %1130 = vmatprep.subr.mxu0 0.0
          %1131 = vmatpush1.msra.mxu0 0.0
          %1132 = vmatprep.subr.mxu0 0.0
          %1133 = vmatpush1.msra.mxu0 0.0
          %1134 = vmatprep.subr.mxu0 0.0
          %1135 = vmatpush1.msra.mxu0 0.0
          %1136 = vmatprep.subr.mxu0 0.0
          %1137 = vmatpush1.msra.mxu0 0.0
          %1138 = vmatprep.subr.mxu0 0.0
          %1139 = vmatpush1.msra.mxu0 0.0
          %1140 = vmatprep.subr.mxu0 0.0
          %1141 = vmatpush1.msra.mxu0 0.0
          %1142 = vmatprep.subr.mxu0 0.0
          %1143 = vmatpush1.msra.mxu0 0.0
          %1144 = vmatprep.subr.mxu0 0.0
          %1145 = vmatpush1.msra.mxu0 0.0
          %1146 = vmatprep.subr.mxu0 0.0
          %1147 = vmatpush1.msra.mxu0 0.0
          %1148 = vmatprep.subr.mxu0 0.0
          %1149 = vmatpush1.msra.mxu0 0.0
          %1150 = vmatprep.subr.mxu0 0.0
          %1151 = vmatpush1.msra.mxu0 0.0
          %1152 = vmatprep.subr.mxu0 0.0
          %1153 = vmatpush1.msra.mxu0 0.0
          %1154 = vmatprep.subr.mxu0 0.0
          %1155 = vmatpush1.msra.mxu0 0.0
          %1156 = vmatprep.subr.mxu0 0.0
          %1157 = vmatpush1.msra.mxu0 0.0
          %1158 = vmatprep.subr.mxu0 0.0
          %1159 = vmatpush1.msra.mxu0 0.0
          %1160 = vmatprep.subr.mxu0 0.0
          %1161 = vmatpush1.msra.mxu0 0.0
          %1162 = vmatprep.subr.mxu0 0.0
          %1163 = vmatpush1.msra.mxu0 0.0
          %1164 = vmatprep.subr.mxu0 0.0
          %1165 = vmatpush1.msra.mxu0 0.0
          %1166 = vmatprep.subr.mxu0 0.0
          %1167 = vmatpush1.msra.mxu0 0.0
          %1168 = vmatprep.subr.mxu0 0.0
          %1169 = vmatpush1.msra.mxu0 0.0
          %1170 = vmatprep.subr.mxu0 0.0
          %1171 = vmatpush1.msra.mxu0 0.0
          %1172 = vmatprep.subr.mxu0 0.0
          %1173 = vmatpush1.msra.mxu0 0.0
          %1174 = vmatprep.subr.mxu0 0.0
          %1175 = vmatpush1.msra.mxu0 0.0
          %1176 = vmatprep.subr.mxu0 0.0
          %1177 = vmatpush1.msra.mxu0 0.0
          %1178 = vmatprep.subr.mxu0 0.0
          %1179 = vmatpush1.msra.mxu0 0.0
          %1180 = vmatprep.subr.mxu0 0.0
          %1181 = vmatpush1.msra.mxu0 0.0
          %1182 = vmatprep.subr.mxu0 0.0
          %1183 = vmatpush1.msra.mxu0 0.0
          %1184 = vmatprep.subr.mxu0 0.0
          %1185 = vmatpush1.msra.mxu0 0.0
          %1186 = vmatprep.mubr.f32.mxu0 0.0
          %v1187 = vand.u32 %v679, 4294901760
          %1188 = vmatmul.mubr.f32.gmra.mrb[0].mxu0 %v1187
          %v1189 = vpop.f32.mrb[0].mxu0
          %v1190 = vadd.f32 %v1083, %v1189
          %v1191 = vpop.f32.mrb[0].mxu0
          %1192 = vmatprep.mubr.f32.mxu0 0.0
          %v1193 = vand.u32 %v682, 4294901760
          %1194 = vmatmul.mubr.f32.gmra.mrb[0].mxu0 %v1193
          %v1195 = vpop.f32.mrb[0].mxu0
          %v1196 = vadd.f32 %v1091, %v1195
          %v1197 = vpop.f32.mrb[0].mxu0
          %1198 = vmatprep.mubr.f32.mxu0 0.0
          %v1199 = vand.u32 %v685, 4294901760
          %1200 = vmatmul.mubr.f32.gmra.mrb[0].mxu0 %v1199
          %v1201 = vpop.f32.mrb[0].mxu0
          %v1202 = vadd.f32 %v1099, %v1201
          %v1203 = vpop.f32.mrb[0].mxu0
          %1204 = vmatprep.mubr.f32.mxu0 0.0
          %v1205 = vand.u32 %v688, 4294901760
          %1206 = vmatmul.mubr.f32.gmra.mrb[0].mxu0 %v1205
          %v1207 = vpop.f32.mrb[0].mxu0
          %v1208 = vadd.f32 %v1107, %v1207
          %v1209 = vpop.f32.mrb[0].mxu0
          %1210 = vdwg.mxu0
          %1211 = vmatprep.subr.mxu0 0.0
          %v1212 = vand.u32 %v669, 4294901760
          %1213 = vmatpush1.msra.mxu0 %v1212
          %1214 = vmatprep.subr.mxu0 0.0
          %v1215 = vand.u32 %v670, 4294901760
          %1216 = vmatpush1.msra.mxu0 %v1215
          %1217 = vmatprep.subr.mxu0 0.0
          %v1218 = vand.u32 %v671, 4294901760
          %1219 = vmatpush1.msra.mxu0 %v1218
          %1220 = vmatprep.subr.mxu0 0.0
          %v1221 = vand.u32 %v672, 4294901760
          %1222 = vmatpush1.msra.mxu0 %v1221
          %1223 = vmatprep.subr.mxu0 0.0
          %1224 = vmatpush1.msra.mxu0 0.0
          %1225 = vmatprep.subr.mxu0 0.0
          %1226 = vmatpush1.msra.mxu0 0.0
          %1227 = vmatprep.subr.mxu0 0.0
          %1228 = vmatpush1.msra.mxu0 0.0
          %1229 = vmatprep.subr.mxu0 0.0
          %1230 = vmatpush1.msra.mxu0 0.0
          %1231 = vmatprep.subr.mxu0 0.0
          %1232 = vmatpush1.msra.mxu0 0.0
          %1233 = vmatprep.subr.mxu0 0.0
          %1234 = vmatpush1.msra.mxu0 0.0
          %1235 = vmatprep.subr.mxu0 0.0
          %1236 = vmatpush1.msra.mxu0 0.0
          %1237 = vmatprep.subr.mxu0 0.0
          %1238 = vmatpush1.msra.mxu0 0.0
          %1239 = vmatprep.subr.mxu0 0.0
          %1240 = vmatpush1.msra.mxu0 0.0
          %1241 = vmatprep.subr.mxu0 0.0
          %1242 = vmatpush1.msra.mxu0 0.0
          %1243 = vmatprep.subr.mxu0 0.0
          %1244 = vmatpush1.msra.mxu0 0.0
          %1245 = vmatprep.subr.mxu0 0.0
          %1246 = vmatpush1.msra.mxu0 0.0
          %1247 = vmatprep.subr.mxu0 0.0
          %1248 = vmatpush1.msra.mxu0 0.0
          %1249 = vmatprep.subr.mxu0 0.0
          %1250 = vmatpush1.msra.mxu0 0.0
          %1251 = vmatprep.subr.mxu0 0.0
          %1252 = vmatpush1.msra.mxu0 0.0
          %1253 = vmatprep.subr.mxu0 0.0
          %1254 = vmatpush1.msra.mxu0 0.0
          %1255 = vmatprep.subr.mxu0 0.0
          %1256 = vmatpush1.msra.mxu0 0.0
          %1257 = vmatprep.subr.mxu0 0.0
          %1258 = vmatpush1.msra.mxu0 0.0
          %1259 = vmatprep.subr.mxu0 0.0
          %1260 = vmatpush1.msra.mxu0 0.0
          %1261 = vmatprep.subr.mxu0 0.0
          %1262 = vmatpush1.msra.mxu0 0.0
          %1263 = vmatprep.subr.mxu0 0.0
          %1264 = vmatpush1.msra.mxu0 0.0
          %1265 = vmatprep.subr.mxu0 0.0
          %1266 = vmatpush1.msra.mxu0 0.0
          %1267 = vmatprep.subr.mxu0 0.0
          %1268 = vmatpush1.msra.mxu0 0.0
          %1269 = vmatprep.subr.mxu0 0.0
          %1270 = vmatpush1.msra.mxu0 0.0
          %1271 = vmatprep.subr.mxu0 0.0
          %1272 = vmatpush1.msra.mxu0 0.0
          %1273 = vmatprep.subr.mxu0 0.0
          %1274 = vmatpush1.msra.mxu0 0.0
          %1275 = vmatprep.subr.mxu0 0.0
          %1276 = vmatpush1.msra.mxu0 0.0
          %1277 = vmatprep.subr.mxu0 0.0
          %1278 = vmatpush1.msra.mxu0 0.0
          %1279 = vmatprep.mubr.f32.mxu0 0.0
          %v1280 = vand.u32 %v679, 4294901760
          %1281 = vmatmul.mubr.f32.gmra.mrb[0].mxu0 %v1280
          %v1282 = vpop.f32.mrb[0].mxu0
          %v1283 = vadd.f32 %v1190, %v1282
          %v1284 = vpop.f32.mrb[0].mxu0
          %1285 = vmatprep.mubr.f32.mxu0 0.0
          %v1286 = vand.u32 %v682, 4294901760
          %1287 = vmatmul.mubr.f32.gmra.mrb[0].mxu0 %v1286
          %v1288 = vpop.f32.mrb[0].mxu0
          %v1289 = vadd.f32 %v1196, %v1288
          %v1290 = vpop.f32.mrb[0].mxu0
          %1291 = vmatprep.mubr.f32.mxu0 0.0
          %v1292 = vand.u32 %v685, 4294901760
          %1293 = vmatmul.mubr.f32.gmra.mrb[0].mxu0 %v1292
          %v1294 = vpop.f32.mrb[0].mxu0
          %v1295 = vadd.f32 %v1202, %v1294
          %v1296 = vpop.f32.mrb[0].mxu0
          %1297 = vmatprep.mubr.f32.mxu0 0.0
          %v1298 = vand.u32 %v688, 4294901760
          %1299 = vmatmul.mubr.f32.gmra.mrb[0].mxu0 %v1298
          %v1300 = vpop.f32.mrb[0].mxu0
          %v1301 = vadd.f32 %v1208, %v1300
          %v1302 = vpop.f32.mrb[0].mxu0
          %1303 = vdwg.mxu0
          // Predicated region
          $region61: #{tpu_custom_call.1} parent=59 // pred_check
            %p1304 = pneg %p373
          $region62: #{tpu_custom_call.1} parent=59 // pred_check_branch
            %1306 = sbr.rel (%p1304) target = $region64
          $region63: #{tpu_custom_call.1} parent=59 // pred_region
            %v1307 = vld [vmem:[#allocation4] sm:$0xff]
            %v1308 = vld [vmem:[#allocation4 + $0x8] sm:$0xff]
            %v1309 = vld [vmem:[#allocation4 + $0x10] sm:$0xff]
            %v1310 = vld [vmem:[#allocation4 + $0x18] sm:$0xff]
            %1311 = vadd.xlane.f32.xlu0 %v1283
            %v1312 = vpop.xlane.xlu0 %1311
            %1313 = vadd.xlane.f32.xlu0 %v1289
            %v1314 = vpop.xlane.xlu0 %1313
            %1315 = vadd.xlane.f32.xlu0 %v1295
            %v1316 = vpop.xlane.xlu0 %1315
            %1317 = vadd.xlane.f32.xlu0 %v1301
            %v1318 = vpop.xlane.xlu0 %1317
            %v1319 = vadd.f32 %v1307, %v1312
            %v1320 = vadd.f32 %v1308, %v1314
            %v1321 = vadd.f32 %v1309, %v1316
            %v1322 = vadd.f32 %v1310, %v1318
            %vm1323 = vcmask 7168
            %1324 = vst.msk [vmem:[#allocation4] sm:$0xff] %vm1323, %v1319
            %1325 = vst.msk [vmem:[#allocation4 + $0x8] sm:$0xff] %vm1323, %v1320
            %1326 = vst.msk [vmem:[#allocation4 + $0x10] sm:$0xff] %vm1323, %v1321
            %1327 = vst.msk [vmem:[#allocation4 + $0x18] sm:$0xff] %vm1323, %v1322
            %v1328 = vld [vmem:[#allocation5] sm:$0xff]
            %v1329 = vld [vmem:[#allocation5 + $0x8] sm:$0xff]
            %v1330 = vld [vmem:[#allocation5 + $0x10] sm:$0xff]
            %v1331 = vld [vmem:[#allocation5 + $0x18] sm:$0xff]
            %v1332 = vmul.f32 %v1283, %v1283
            %v1333 = vmul.f32 %v1289, %v1289
            %v1334 = vmul.f32 %v1295, %v1295
            %v1335 = vmul.f32 %v1301, %v1301
            %1336 = vadd.xlane.f32.xlu0 %v1332
            %v1337 = vpop.xlane.xlu0 %1336
            %1338 = vadd.xlane.f32.xlu0 %v1333
            %v1339 = vpop.xlane.xlu0 %1338
            %1340 = vadd.xlane.f32.xlu0 %v1334
            %v1341 = vpop.xlane.xlu0 %1340
            %1342 = vadd.xlane.f32.xlu0 %v1335
            %v1343 = vpop.xlane.xlu0 %1342
            %v1344 = vadd.f32 %v1328, %v1337
            %v1345 = vadd.f32 %v1329, %v1339
            %v1346 = vadd.f32 %v1330, %v1341
            %v1347 = vadd.f32 %v1331, %v1343
            %1348 = vst.msk [vmem:[#allocation5] sm:$0xff] %vm1323, %v1344
            %1349 = vst.msk [vmem:[#allocation5 + $0x8] sm:$0xff] %vm1323, %v1345
            %1350 = vst.msk [vmem:[#allocation5 + $0x10] sm:$0xff] %vm1323, %v1346
            %1351 = vst.msk [vmem:[#allocation5 + $0x18] sm:$0xff] %vm1323, %v1347
          $region64: #{tpu_custom_call.1} parent=59 // pred_fallthru
            _
          // Predicated region
          $region65: #{tpu_custom_call.1} parent=59 // pred_check
            %p1352 = pneg %p475
          $region66: #{tpu_custom_call.1} parent=59 // pred_check_branch
            %1354 = sbr.rel (%p1352) target = $region68
          $region67: #{tpu_custom_call.1} parent=59 // pred_region
            %v1355 = vld [vmem:[#allocation4] sm:$0xff]
            %v1356 = vld [vmem:[#allocation4 + $0x8] sm:$0xff]
            %v1357 = vld [vmem:[#allocation4 + $0x10] sm:$0xff]
            %v1358 = vld [vmem:[#allocation4 + $0x18] sm:$0xff]
            %1360 = vset.pattern.permute.xlu0 0
            %1361 = vperm.xlu0 %1360, %v1355
            %v1362 = vpop.permute.xlu0 %1361
            %1365 = vset.pattern.permute.xlu0 0
            %1366 = vperm.xlu0 %1365, %v1356
            %v1367 = vpop.permute.xlu0 %1366
            %1370 = vset.pattern.permute.xlu0 0
            %1371 = vperm.xlu0 %1370, %v1357
            %v1372 = vpop.permute.xlu0 %1371
            %1375 = vset.pattern.permute.xlu0 0
            %1376 = vperm.xlu0 %1375, %v1358
            %v1377 = vpop.permute.xlu0 %1376
            %v1379 = vmul.f32 %v1283, %v1362
            %v1380 = vmul.f32 %v1289, %v1367
            %v1381 = vmul.f32 %v1295, %v1372
            %v1382 = vmul.f32 %v1301, %v1377
            %v1383 = vld [vmem:[#allocation5] sm:$0xff]
            %v1384 = vld [vmem:[#allocation5 + $0x8] sm:$0xff]
            %v1385 = vld [vmem:[#allocation5 + $0x10] sm:$0xff]
            %v1386 = vld [vmem:[#allocation5 + $0x18] sm:$0xff]
            %1388 = vset.pattern.permute.xlu0 0
            %1389 = vperm.xlu0 %1388, %v1383
            %v1390 = vpop.permute.xlu0 %1389
            %1393 = vset.pattern.permute.xlu0 0
            %1394 = vperm.xlu0 %1393, %v1384
            %v1395 = vpop.permute.xlu0 %1394
            %1398 = vset.pattern.permute.xlu0 0
            %1399 = vperm.xlu0 %1398, %v1385
            %v1400 = vpop.permute.xlu0 %1399
            %1403 = vset.pattern.permute.xlu0 0
            %1404 = vperm.xlu0 %1403, %v1386
            %v1405 = vpop.permute.xlu0 %1404
            %v1407 = vadd.f32 %v1379, %v1390
            %v1408 = vadd.f32 %v1380, %v1395
            %v1409 = vadd.f32 %v1381, %v1400
            %v1410 = vadd.f32 %v1382, %v1405
            %v1411 = vld [vmem:[%s4] sm:$0x1]
            %v1413 = vsel %vm677, %v1411, 0
            %1415 = vmatprep.subr.mxu0 0.0
            %v1416 = vand.u32 %v1407, 4294901760
            %1417 = vmatpush1.msra.mxu0 %v1416
            %1418 = vmatprep.subr.mxu0 0.0
            %v1419 = vand.u32 %v1408, 4294901760
            %1420 = vmatpush1.msra.mxu0 %v1419
            %1421 = vmatprep.subr.mxu0 0.0
            %v1422 = vand.u32 %v1409, 4294901760
            %1423 = vmatpush1.msra.mxu0 %v1422
            %1424 = vmatprep.subr.mxu0 0.0
            %v1425 = vand.u32 %v1410, 4294901760
            %1426 = vmatpush1.msra.mxu0 %v1425
            %1427 = vmatprep.subr.mxu0 0.0
            %1428 = vmatpush1.msra.mxu0 0.0
            %1429 = vmatprep.subr.mxu0 0.0
            %1430 = vmatpush1.msra.mxu0 0.0
            %1431 = vmatprep.subr.mxu0 0.0
            %1432 = vmatpush1.msra.mxu0 0.0
            %1433 = vmatprep.subr.mxu0 0.0
            %1434 = vmatpush1.msra.mxu0 0.0
            %1435 = vmatprep.subr.mxu0 0.0
            %1436 = vmatpush1.msra.mxu0 0.0
            %1437 = vmatprep.subr.mxu0 0.0
            %1438 = vmatpush1.msra.mxu0 0.0
            %1439 = vmatprep.subr.mxu0 0.0
            %1440 = vmatpush1.msra.mxu0 0.0
            %1441 = vmatprep.subr.mxu0 0.0
            %1442 = vmatpush1.msra.mxu0 0.0
            %1443 = vmatprep.subr.mxu0 0.0
            %1444 = vmatpush1.msra.mxu0 0.0
            %1445 = vmatprep.subr.mxu0 0.0
            %1446 = vmatpush1.msra.mxu0 0.0
            %1447 = vmatprep.subr.mxu0 0.0
            %1448 = vmatpush1.msra.mxu0 0.0
            %1449 = vmatprep.subr.mxu0 0.0
            %1450 = vmatpush1.msra.mxu0 0.0
            %1451 = vmatprep.subr.mxu0 0.0
            %1452 = vmatpush1.msra.mxu0 0.0
            %1453 = vmatprep.subr.mxu0 0.0
            %1454 = vmatpush1.msra.mxu0 0.0
            %1455 = vmatprep.subr.mxu0 0.0
            %1456 = vmatpush1.msra.mxu0 0.0
            %1457 = vmatprep.subr.mxu0 0.0
            %1458 = vmatpush1.msra.mxu0 0.0
            %1459 = vmatprep.subr.mxu0 0.0
            %1460 = vmatpush1.msra.mxu0 0.0
            %1461 = vmatprep.subr.mxu0 0.0
            %1462 = vmatpush1.msra.mxu0 0.0
            %1463 = vmatprep.subr.mxu0 0.0
            %1464 = vmatpush1.msra.mxu0 0.0
            %1465 = vmatprep.subr.mxu0 0.0
            %1466 = vmatpush1.msra.mxu0 0.0
            %1467 = vmatprep.subr.mxu0 0.0
            %1468 = vmatpush1.msra.mxu0 0.0
            %1469 = vmatprep.subr.mxu0 0.0
            %1470 = vmatpush1.msra.mxu0 0.0
            %1471 = vmatprep.subr.mxu0 0.0
            %1472 = vmatpush1.msra.mxu0 0.0
            %1473 = vmatprep.subr.mxu0 0.0
            %1474 = vmatpush1.msra.mxu0 0.0
            %1475 = vmatprep.subr.mxu0 0.0
            %1476 = vmatpush1.msra.mxu0 0.0
            %1477 = vmatprep.subr.mxu0 0.0
            %1478 = vmatpush1.msra.mxu0 0.0
            %1479 = vmatprep.subr.mxu0 0.0
            %1480 = vmatpush1.msra.mxu0 0.0
            %1481 = vmatprep.subr.mxu0 0.0
            %1482 = vmatpush1.msra.mxu0 0.0
            %1483 = vmatprep.mubr.f32.mxu0 0.0
            %v1484 = vand.u32 %v1413, 4294901760
            %v1485 = vsub.f32 %v1413, %v1484
            %v1486 = vand.u32 %v1485, 4294901760
            %v1487 = vsub.f32 %v1485, %v1486
            %v1488 = vand.u32 %v1487, 4294901760
            %1489 = vmatmul.mubr.f32.gmra.mrb[0].mxu0 %v1488
            %v1490 = vpop.f32.mrb[0].mxu0
            %v1491 = vadd.f32 0.0, %v1490
            %v1492 = vpop.f32.mrb[0].mxu0
            %1493 = vdwg.mxu0
            %1494 = vmatprep.subr.mxu0 0.0
            %v1495 = vand.u32 %v1407, 4294901760
            %v1496 = vsub.f32 %v1407, %v1495
            %v1497 = vand.u32 %v1496, 4294901760
            %v1498 = vsub.f32 %v1496, %v1497
            %v1499 = vand.u32 %v1498, 4294901760
            %1500 = vmatpush1.msra.mxu0 %v1499
            %1501 = vmatprep.subr.mxu0 0.0
            %v1502 = vand.u32 %v1408, 4294901760
            %v1503 = vsub.f32 %v1408, %v1502
            %v1504 = vand.u32 %v1503, 4294901760
            %v1505 = vsub.f32 %v1503, %v1504
            %v1506 = vand.u32 %v1505, 4294901760
            %1507 = vmatpush1.msra.mxu0 %v1506
            %1508 = vmatprep.subr.mxu0 0.0
            %v1509 = vand.u32 %v1409, 4294901760
            %v1510 = vsub.f32 %v1409, %v1509
            %v1511 = vand.u32 %v1510, 4294901760
            %v1512 = vsub.f32 %v1510, %v1511
            %v1513 = vand.u32 %v1512, 4294901760
            %1514 = vmatpush1.msra.mxu0 %v1513
            %1515 = vmatprep.subr.mxu0 0.0
            %v1516 = vand.u32 %v1410, 4294901760
            %v1517 = vsub.f32 %v1410, %v1516
            %v1518 = vand.u32 %v1517, 4294901760
            %v1519 = vsub.f32 %v1517, %v1518
            %v1520 = vand.u32 %v1519, 4294901760
            %1521 = vmatpush1.msra.mxu0 %v1520
            %1522 = vmatprep.subr.mxu0 0.0
            %1523 = vmatpush1.msra.mxu0 0.0
            %1524 = vmatprep.subr.mxu0 0.0
            %1525 = vmatpush1.msra.mxu0 0.0
            %1526 = vmatprep.subr.mxu0 0.0
            %1527 = vmatpush1.msra.mxu0 0.0
            %1528 = vmatprep.subr.mxu0 0.0
            %1529 = vmatpush1.msra.mxu0 0.0
            %1530 = vmatprep.subr.mxu0 0.0
            %1531 = vmatpush1.msra.mxu0 0.0
            %1532 = vmatprep.subr.mxu0 0.0
            %1533 = vmatpush1.msra.mxu0 0.0
            %1534 = vmatprep.subr.mxu0 0.0
            %1535 = vmatpush1.msra.mxu0 0.0
            %1536 = vmatprep.subr.mxu0 0.0
            %1537 = vmatpush1.msra.mxu0 0.0
            %1538 = vmatprep.subr.mxu0 0.0
            %1539 = vmatpush1.msra.mxu0 0.0
            %1540 = vmatprep.subr.mxu0 0.0
            %1541 = vmatpush1.msra.mxu0 0.0
            %1542 = vmatprep.subr.mxu0 0.0
            %1543 = vmatpush1.msra.mxu0 0.0
            %1544 = vmatprep.subr.mxu0 0.0
            %1545 = vmatpush1.msra.mxu0 0.0
            %1546 = vmatprep.subr.mxu0 0.0
            %1547 = vmatpush1.msra.mxu0 0.0
            %1548 = vmatprep.subr.mxu0 0.0
            %1549 = vmatpush1.msra.mxu0 0.0
            %1550 = vmatprep.subr.mxu0 0.0
            %1551 = vmatpush1.msra.mxu0 0.0
            %1552 = vmatprep.subr.mxu0 0.0
            %1553 = vmatpush1.msra.mxu0 0.0
            %1554 = vmatprep.subr.mxu0 0.0
            %1555 = vmatpush1.msra.mxu0 0.0
            %1556 = vmatprep.subr.mxu0 0.0
            %1557 = vmatpush1.msra.mxu0 0.0
            %1558 = vmatprep.subr.mxu0 0.0
            %1559 = vmatpush1.msra.mxu0 0.0
            %1560 = vmatprep.subr.mxu0 0.0
            %1561 = vmatpush1.msra.mxu0 0.0
            %1562 = vmatprep.subr.mxu0 0.0
            %1563 = vmatpush1.msra.mxu0 0.0
            %1564 = vmatprep.subr.mxu0 0.0
            %1565 = vmatpush1.msra.mxu0 0.0
            %1566 = vmatprep.subr.mxu0 0.0
            %1567 = vmatpush1.msra.mxu0 0.0
            %1568 = vmatprep.subr.mxu0 0.0
            %1569 = vmatpush1.msra.mxu0 0.0
            %1570 = vmatprep.subr.mxu0 0.0
            %1571 = vmatpush1.msra.mxu0 0.0
            %1572 = vmatprep.subr.mxu0 0.0
            %1573 = vmatpush1.msra.mxu0 0.0
            %1574 = vmatprep.subr.mxu0 0.0
            %1575 = vmatpush1.msra.mxu0 0.0
            %1576 = vmatprep.subr.mxu0 0.0
            %1577 = vmatpush1.msra.mxu0 0.0
            %1578 = vmatprep.mubr.f32.mxu0 0.0
            %v1579 = vand.u32 %v1413, 4294901760
            %1580 = vmatmul.mubr.f32.gmra.mrb[0].mxu0 %v1579
            %v1581 = vpop.f32.mrb[0].mxu0
            %v1582 = vadd.f32 %v1491, %v1581
            %v1583 = vpop.f32.mrb[0].mxu0
            %1584 = vdwg.mxu0
            %1585 = vmatprep.subr.mxu0 0.0
            %v1586 = vand.u32 %v1407, 4294901760
            %v1587 = vsub.f32 %v1407, %v1586
            %1588 = vmatpush1.msra.mxu0 %v1587
            %1589 = vmatprep.subr.mxu0 0.0
            %v1590 = vand.u32 %v1408, 4294901760
            %v1591 = vsub.f32 %v1408, %v1590
            %1592 = vmatpush1.msra.mxu0 %v1591
            %1593 = vmatprep.subr.mxu0 0.0
            %v1594 = vand.u32 %v1409, 4294901760
            %v1595 = vsub.f32 %v1409, %v1594
            %1596 = vmatpush1.msra.mxu0 %v1595
            %1597 = vmatprep.subr.mxu0 0.0
            %v1598 = vand.u32 %v1410, 4294901760
            %v1599 = vsub.f32 %v1410, %v1598
            %1600 = vmatpush1.msra.mxu0 %v1599
            %1601 = vmatprep.subr.mxu0 0.0
            %1602 = vmatpush1.msra.mxu0 0.0
            %1603 = vmatprep.subr.mxu0 0.0
            %1604 = vmatpush1.msra.mxu0 0.0
            %1605 = vmatprep.subr.mxu0 0.0
            %1606 = vmatpush1.msra.mxu0 0.0
            %1607 = vmatprep.subr.mxu0 0.0
            %1608 = vmatpush1.msra.mxu0 0.0
            %1609 = vmatprep.subr.mxu0 0.0
            %1610 = vmatpush1.msra.mxu0 0.0
            %1611 = vmatprep.subr.mxu0 0.0
            %1612 = vmatpush1.msra.mxu0 0.0
            %1613 = vmatprep.subr.mxu0 0.0
            %1614 = vmatpush1.msra.mxu0 0.0
            %1615 = vmatprep.subr.mxu0 0.0
            %1616 = vmatpush1.msra.mxu0 0.0
            %1617 = vmatprep.subr.mxu0 0.0
            %1618 = vmatpush1.msra.mxu0 0.0
            %1619 = vmatprep.subr.mxu0 0.0
            %1620 = vmatpush1.msra.mxu0 0.0
            %1621 = vmatprep.subr.mxu0 0.0
            %1622 = vmatpush1.msra.mxu0 0.0
            %1623 = vmatprep.subr.mxu0 0.0
            %1624 = vmatpush1.msra.mxu0 0.0
            %1625 = vmatprep.subr.mxu0 0.0
            %1626 = vmatpush1.msra.mxu0 0.0
            %1627 = vmatprep.subr.mxu0 0.0
            %1628 = vmatpush1.msra.mxu0 0.0
            %1629 = vmatprep.subr.mxu0 0.0
            %1630 = vmatpush1.msra.mxu0 0.0
            %1631 = vmatprep.subr.mxu0 0.0
            %1632 = vmatpush1.msra.mxu0 0.0
            %1633 = vmatprep.subr.mxu0 0.0
            %1634 = vmatpush1.msra.mxu0 0.0
            %1635 = vmatprep.subr.mxu0 0.0
            %1636 = vmatpush1.msra.mxu0 0.0
            %1637 = vmatprep.subr.mxu0 0.0
            %1638 = vmatpush1.msra.mxu0 0.0
            %1639 = vmatprep.subr.mxu0 0.0
            %1640 = vmatpush1.msra.mxu0 0.0
            %1641 = vmatprep.subr.mxu0 0.0
            %1642 = vmatpush1.msra.mxu0 0.0
            %1643 = vmatprep.subr.mxu0 0.0
            %1644 = vmatpush1.msra.mxu0 0.0
            %1645 = vmatprep.subr.mxu0 0.0
            %1646 = vmatpush1.msra.mxu0 0.0
            %1647 = vmatprep.subr.mxu0 0.0
            %1648 = vmatpush1.msra.mxu0 0.0
            %1649 = vmatprep.subr.mxu0 0.0
            %1650 = vmatpush1.msra.mxu0 0.0
            %1651 = vmatprep.subr.mxu0 0.0
            %1652 = vmatpush1.msra.mxu0 0.0
            %1653 = vmatprep.subr.mxu0 0.0
            %1654 = vmatpush1.msra.mxu0 0.0
            %1655 = vmatprep.subr.mxu0 0.0
            %1656 = vmatpush1.msra.mxu0 0.0
            %1657 = vmatprep.mubr.f32.mxu0 0.0
            %v1658 = vand.u32 %v1413, 4294901760
            %v1659 = vsub.f32 %v1413, %v1658
            %1660 = vmatmul.mubr.f32.gmra.mrb[0].mxu0 %v1659
            %v1661 = vpop.f32.mrb[0].mxu0
            %v1662 = vadd.f32 %v1582, %v1661
            %v1663 = vpop.f32.mrb[0].mxu0
            %1664 = vdwg.mxu0
            %1665 = vmatprep.subr.mxu0 0.0
            %v1666 = vand.u32 %v1407, 4294901760
            %1667 = vmatpush1.msra.mxu0 %v1666
            %1668 = vmatprep.subr.mxu0 0.0
            %v1669 = vand.u32 %v1408, 4294901760
            %1670 = vmatpush1.msra.mxu0 %v1669
            %1671 = vmatprep.subr.mxu0 0.0
            %v1672 = vand.u32 %v1409, 4294901760
            %1673 = vmatpush1.msra.mxu0 %v1672
            %1674 = vmatprep.subr.mxu0 0.0
            %v1675 = vand.u32 %v1410, 4294901760
            %1676 = vmatpush1.msra.mxu0 %v1675
            %1677 = vmatprep.subr.mxu0 0.0
            %1678 = vmatpush1.msra.mxu0 0.0
            %1679 = vmatprep.subr.mxu0 0.0
            %1680 = vmatpush1.msra.mxu0 0.0
            %1681 = vmatprep.subr.mxu0 0.0
            %1682 = vmatpush1.msra.mxu0 0.0
            %1683 = vmatprep.subr.mxu0 0.0
            %1684 = vmatpush1.msra.mxu0 0.0
            %1685 = vmatprep.subr.mxu0 0.0
            %1686 = vmatpush1.msra.mxu0 0.0
            %1687 = vmatprep.subr.mxu0 0.0
            %1688 = vmatpush1.msra.mxu0 0.0
            %1689 = vmatprep.subr.mxu0 0.0
            %1690 = vmatpush1.msra.mxu0 0.0
            %1691 = vmatprep.subr.mxu0 0.0
            %1692 = vmatpush1.msra.mxu0 0.0
            %1693 = vmatprep.subr.mxu0 0.0
            %1694 = vmatpush1.msra.mxu0 0.0
            %1695 = vmatprep.subr.mxu0 0.0
            %1696 = vmatpush1.msra.mxu0 0.0
            %1697 = vmatprep.subr.mxu0 0.0
            %1698 = vmatpush1.msra.mxu0 0.0
            %1699 = vmatprep.subr.mxu0 0.0
            %1700 = vmatpush1.msra.mxu0 0.0
            %1701 = vmatprep.subr.mxu0 0.0
            %1702 = vmatpush1.msra.mxu0 0.0
            %1703 = vmatprep.subr.mxu0 0.0
            %1704 = vmatpush1.msra.mxu0 0.0
            %1705 = vmatprep.subr.mxu0 0.0
            %1706 = vmatpush1.msra.mxu0 0.0
            %1707 = vmatprep.subr.mxu0 0.0
            %1708 = vmatpush1.msra.mxu0 0.0
            %1709 = vmatprep.subr.mxu0 0.0
            %1710 = vmatpush1.msra.mxu0 0.0
            %1711 = vmatprep.subr.mxu0 0.0
            %1712 = vmatpush1.msra.mxu0 0.0
            %1713 = vmatprep.subr.mxu0 0.0
            %1714 = vmatpush1.msra.mxu0 0.0
            %1715 = vmatprep.subr.mxu0 0.0
            %1716 = vmatpush1.msra.mxu0 0.0
            %1717 = vmatprep.subr.mxu0 0.0
            %1718 = vmatpush1.msra.mxu0 0.0
            %1719 = vmatprep.subr.mxu0 0.0
            %1720 = vmatpush1.msra.mxu0 0.0
            %1721 = vmatprep.subr.mxu0 0.0
            %1722 = vmatpush1.msra.mxu0 0.0
            %1723 = vmatprep.subr.mxu0 0.0
            %1724 = vmatpush1.msra.mxu0 0.0
            %1725 = vmatprep.subr.mxu0 0.0
            %1726 = vmatpush1.msra.mxu0 0.0
            %1727 = vmatprep.subr.mxu0 0.0
            %1728 = vmatpush1.msra.mxu0 0.0
            %1729 = vmatprep.subr.mxu0 0.0
            %1730 = vmatpush1.msra.mxu0 0.0
            %1731 = vmatprep.subr.mxu0 0.0
            %1732 = vmatpush1.msra.mxu0 0.0
            %1733 = vmatprep.mubr.f32.mxu0 0.0
            %v1734 = vand.u32 %v1413, 4294901760
            %v1735 = vsub.f32 %v1413, %v1734
            %v1736 = vand.u32 %v1735, 4294901760
            %1737 = vmatmul.mubr.f32.gmra.mrb[0].mxu0 %v1736
            %v1738 = vpop.f32.mrb[0].mxu0
            %v1739 = vadd.f32 %v1662, %v1738
            %v1740 = vpop.f32.mrb[0].mxu0
            %1741 = vdwg.mxu0
            %1742 = vmatprep.subr.mxu0 0.0
            %v1743 = vand.u32 %v1407, 4294901760
            %v1744 = vsub.f32 %v1407, %v1743
            %v1745 = vand.u32 %v1744, 4294901760
            %1746 = vmatpush1.msra.mxu0 %v1745
            %1747 = vmatprep.subr.mxu0 0.0
            %v1748 = vand.u32 %v1408, 4294901760
            %v1749 = vsub.f32 %v1408, %v1748
            %v1750 = vand.u32 %v1749, 4294901760
            %1751 = vmatpush1.msra.mxu0 %v1750
            %1752 = vmatprep.subr.mxu0 0.0
            %v1753 = vand.u32 %v1409, 4294901760
            %v1754 = vsub.f32 %v1409, %v1753
            %v1755 = vand.u32 %v1754, 4294901760
            %1756 = vmatpush1.msra.mxu0 %v1755
            %1757 = vmatprep.subr.mxu0 0.0
            %v1758 = vand.u32 %v1410, 4294901760
            %v1759 = vsub.f32 %v1410, %v1758
            %v1760 = vand.u32 %v1759, 4294901760
            %1761 = vmatpush1.msra.mxu0 %v1760
            %1762 = vmatprep.subr.mxu0 0.0
            %1763 = vmatpush1.msra.mxu0 0.0
            %1764 = vmatprep.subr.mxu0 0.0
            %1765 = vmatpush1.msra.mxu0 0.0
            %1766 = vmatprep.subr.mxu0 0.0
            %1767 = vmatpush1.msra.mxu0 0.0
            %1768 = vmatprep.subr.mxu0 0.0
            %1769 = vmatpush1.msra.mxu0 0.0
            %1770 = vmatprep.subr.mxu0 0.0
            %1771 = vmatpush1.msra.mxu0 0.0
            %1772 = vmatprep.subr.mxu0 0.0
            %1773 = vmatpush1.msra.mxu0 0.0
            %1774 = vmatprep.subr.mxu0 0.0
            %1775 = vmatpush1.msra.mxu0 0.0
            %1776 = vmatprep.subr.mxu0 0.0
            %1777 = vmatpush1.msra.mxu0 0.0
            %1778 = vmatprep.subr.mxu0 0.0
            %1779 = vmatpush1.msra.mxu0 0.0
            %1780 = vmatprep.subr.mxu0 0.0
            %1781 = vmatpush1.msra.mxu0 0.0
            %1782 = vmatprep.subr.mxu0 0.0
            %1783 = vmatpush1.msra.mxu0 0.0
            %1784 = vmatprep.subr.mxu0 0.0
            %1785 = vmatpush1.msra.mxu0 0.0
            %1786 = vmatprep.subr.mxu0 0.0
            %1787 = vmatpush1.msra.mxu0 0.0
            %1788 = vmatprep.subr.mxu0 0.0
            %1789 = vmatpush1.msra.mxu0 0.0
            %1790 = vmatprep.subr.mxu0 0.0
            %1791 = vmatpush1.msra.mxu0 0.0
            %1792 = vmatprep.subr.mxu0 0.0
            %1793 = vmatpush1.msra.mxu0 0.0
            %1794 = vmatprep.subr.mxu0 0.0
            %1795 = vmatpush1.msra.mxu0 0.0
            %1796 = vmatprep.subr.mxu0 0.0
            %1797 = vmatpush1.msra.mxu0 0.0
            %1798 = vmatprep.subr.mxu0 0.0
            %1799 = vmatpush1.msra.mxu0 0.0
            %1800 = vmatprep.subr.mxu0 0.0
            %1801 = vmatpush1.msra.mxu0 0.0
            %1802 = vmatprep.subr.mxu0 0.0
            %1803 = vmatpush1.msra.mxu0 0.0
            %1804 = vmatprep.subr.mxu0 0.0
            %1805 = vmatpush1.msra.mxu0 0.0
            %1806 = vmatprep.subr.mxu0 0.0
            %1807 = vmatpush1.msra.mxu0 0.0
            %1808 = vmatprep.subr.mxu0 0.0
            %1809 = vmatpush1.msra.mxu0 0.0
            %1810 = vmatprep.subr.mxu0 0.0
            %1811 = vmatpush1.msra.mxu0 0.0
            %1812 = vmatprep.subr.mxu0 0.0
            %1813 = vmatpush1.msra.mxu0 0.0
            %1814 = vmatprep.subr.mxu0 0.0
            %1815 = vmatpush1.msra.mxu0 0.0
            %1816 = vmatprep.subr.mxu0 0.0
            %1817 = vmatpush1.msra.mxu0 0.0
            %1818 = vmatprep.mubr.f32.mxu0 0.0
            %v1819 = vand.u32 %v1413, 4294901760
            %1820 = vmatmul.mubr.f32.gmra.mrb[0].mxu0 %v1819
            %v1821 = vpop.f32.mrb[0].mxu0
            %v1822 = vadd.f32 %v1739, %v1821
            %v1823 = vpop.f32.mrb[0].mxu0
            %1824 = vdwg.mxu0
            %1825 = vmatprep.subr.mxu0 0.0
            %v1826 = vand.u32 %v1407, 4294901760
            %1827 = vmatpush1.msra.mxu0 %v1826
            %1828 = vmatprep.subr.mxu0 0.0
            %v1829 = vand.u32 %v1408, 4294901760
            %1830 = vmatpush1.msra.mxu0 %v1829
            %1831 = vmatprep.subr.mxu0 0.0
            %v1832 = vand.u32 %v1409, 4294901760
            %1833 = vmatpush1.msra.mxu0 %v1832
            %1834 = vmatprep.subr.mxu0 0.0
            %v1835 = vand.u32 %v1410, 4294901760
            %1836 = vmatpush1.msra.mxu0 %v1835
            %1837 = vmatprep.subr.mxu0 0.0
            %1838 = vmatpush1.msra.mxu0 0.0
            %1839 = vmatprep.subr.mxu0 0.0
            %1840 = vmatpush1.msra.mxu0 0.0
            %1841 = vmatprep.subr.mxu0 0.0
            %1842 = vmatpush1.msra.mxu0 0.0
            %1843 = vmatprep.subr.mxu0 0.0
            %1844 = vmatpush1.msra.mxu0 0.0
            %1845 = vmatprep.subr.mxu0 0.0
            %1846 = vmatpush1.msra.mxu0 0.0
            %1847 = vmatprep.subr.mxu0 0.0
            %1848 = vmatpush1.msra.mxu0 0.0
            %1849 = vmatprep.subr.mxu0 0.0
            %1850 = vmatpush1.msra.mxu0 0.0
            %1851 = vmatprep.subr.mxu0 0.0
            %1852 = vmatpush1.msra.mxu0 0.0
            %1853 = vmatprep.subr.mxu0 0.0
            %1854 = vmatpush1.msra.mxu0 0.0
            %1855 = vmatprep.subr.mxu0 0.0
            %1856 = vmatpush1.msra.mxu0 0.0
            %1857 = vmatprep.subr.mxu0 0.0
            %1858 = vmatpush1.msra.mxu0 0.0
            %1859 = vmatprep.subr.mxu0 0.0
            %1860 = vmatpush1.msra.mxu0 0.0
            %1861 = vmatprep.subr.mxu0 0.0
            %1862 = vmatpush1.msra.mxu0 0.0
            %1863 = vmatprep.subr.mxu0 0.0
            %1864 = vmatpush1.msra.mxu0 0.0
            %1865 = vmatprep.subr.mxu0 0.0
            %1866 = vmatpush1.msra.mxu0 0.0
            %1867 = vmatprep.subr.mxu0 0.0
            %1868 = vmatpush1.msra.mxu0 0.0
            %1869 = vmatprep.subr.mxu0 0.0
            %1870 = vmatpush1.msra.mxu0 0.0
            %1871 = vmatprep.subr.mxu0 0.0
            %1872 = vmatpush1.msra.mxu0 0.0
            %1873 = vmatprep.subr.mxu0 0.0
            %1874 = vmatpush1.msra.mxu0 0.0
            %1875 = vmatprep.subr.mxu0 0.0
            %1876 = vmatpush1.msra.mxu0 0.0
            %1877 = vmatprep.subr.mxu0 0.0
            %1878 = vmatpush1.msra.mxu0 0.0
            %1879 = vmatprep.subr.mxu0 0.0
            %1880 = vmatpush1.msra.mxu0 0.0
            %1881 = vmatprep.subr.mxu0 0.0
            %1882 = vmatpush1.msra.mxu0 0.0
            %1883 = vmatprep.subr.mxu0 0.0
            %1884 = vmatpush1.msra.mxu0 0.0
            %1885 = vmatprep.subr.mxu0 0.0
            %1886 = vmatpush1.msra.mxu0 0.0
            %1887 = vmatprep.subr.mxu0 0.0
            %1888 = vmatpush1.msra.mxu0 0.0
            %1889 = vmatprep.subr.mxu0 0.0
            %1890 = vmatpush1.msra.mxu0 0.0
            %1891 = vmatprep.subr.mxu0 0.0
            %1892 = vmatpush1.msra.mxu0 0.0
            %1893 = vmatprep.mubr.f32.mxu0 0.0
            %v1894 = vand.u32 %v1413, 4294901760
            %1895 = vmatmul.mubr.f32.gmra.mrb[0].mxu0 %v1894
            %v1896 = vpop.f32.mrb[0].mxu0
            %v1897 = vadd.f32 %v1822, %v1896
            %v1898 = vpop.f32.mrb[0].mxu0
            %1899 = vdwg.mxu0
            %1900 = vst [vmem:[%s228] sm:$0x1] %v1897
          $region68: #{tpu_custom_call.1} parent=59 // pred_fallthru
            _
        $region60: #{tpu_custom_call.1} parent=39 // pred_fallthru
          _
        %s1901 = sand.u32 %s151, 1
        %s1902 = scalar_lea.sflag [#allocation7], %s1901
        %s1903 = sand.u32 %s151, 1
        %s1904 = scalar_lea.vmem [#allocation6], %s1903
        // Predicated region
        $region69: #{tpu_custom_call.1} parent=39 // pred_check
          %p1905 = pneg %p161
        $region70: #{tpu_custom_call.1} parent=39 // pred_check_branch
          %1907 = sbr.rel (%p1905) target = $region72
        $region71: #{tpu_custom_call.1} parent=39 // pred_region
          %s1909 = ssub.s32 16, 16
          %1910 = vsyncadd %s1902, %s1909
          %s1911 = sadd.s32 %s24, %s23
          %s1912 = smul.addr %s1911, 16
          %s1913 = scalar_lea.hbm %s5, %s1912
          %s1915 = sshll.u32 %s1904, 4
          %s1916 = int_to_ptr.vmem [resolvable:$true] %s1915
          %1918 = dma.vmem_to_hbm [thread:$0]  %s1916, 16, %s1913, %s1902
        $region72: #{tpu_custom_call.1} parent=39 // pred_fallthru
          _
      $region40: #{tpu_custom_call.1} parent=5 // pred_fallthru
        _
      %p1919 = scmp.le.s32.totalorder 2, %s14
      // Predicated region
      $region73: #{tpu_custom_call.1} parent=5 // pred_check
        %p1920 = pneg %p1919
      $region74: #{tpu_custom_call.1} parent=5 // pred_check_branch
        %1922 = sbr.rel (%p1920) target = $region76
      $region75: #{tpu_custom_call.1} parent=5 // pred_region
        %s1923 = ssub.s32 %s14, 2
        // Predicated region
        $region77: #{tpu_custom_call.1} parent=75 // pred_check
          %p1924 = pneg %p167
        $region78: #{tpu_custom_call.1} parent=75 // pred_check_branch
          %1926 = sbr.rel (%p1924) target = $region80
        $region79: #{tpu_custom_call.1} parent=75 // pred_region
          %s1927 = sand.u32 %s152, 1
          %s1928 = scalar_lea.sflag [#allocation7], %s1927
          %s1929 = sand.u32 %s152, 1
          %s1930 = scalar_lea.vmem [#allocation6], %s1929
          %1931 = dma.done %s1928, 16
        $region80: #{tpu_custom_call.1} parent=75 // pred_fallthru
          _
      $region76: #{tpu_custom_call.1} parent=5 // pred_fallthru
        _
    $region6: #{tpu_custom_call.1} parent=1 // loop_footer
      %s18 = sadd.s32 1, %s14
    $region7: #{tpu_custom_call.1} parent=1 // loop_footer_branch
      %13 = sbr.rel target = $region3
    $region8: #{tpu_custom_call.1} parent=1 // loop_exit
      _
    %1932 = vsyncpa [#allocation7], 1
    %s1933 = scalar_lea.sflag [#allocation7], 1
    %1934 = vsyncpa %s1933, 1

</llo_original>
